<compile_context>
chip_gen: v5e
topology: v5e:2x2
jax: 0.10.0
libtpu: 0.0.40
codegen_flags: <defaults>
</compile_context>

<pallas_src>
import functools

import jax
import jax.numpy as jnp
import numpy as np
from jax import lax
from jax.experimental import pallas as pl
from jax.experimental.pallas import tpu as pltpu


def _round_up(x, m):
    return (x + m - 1) // m * m


def _cdiv(a, b):
    return -(-a // b)


def _vmem_budget_and_limit():
    """Generation-aware VMEM budget for tile sizing + the scoped limit for Mosaic."""
    cap = None
    try:
        get_info = getattr(pltpu, "get_tpu_info", None)
        if get_info is not None:
            cap = getattr(get_info(), "vmem_capacity_bytes", None)
    except Exception:
        cap = None
    if not cap:
        cap = 64 * 1024 * 1024  # conservative fallback (v7x per-core physical VMEM)
    budget = min(int(cap * 0.70), 96 * 1024 * 1024)   # what the tile chooser may spend
    limit = min(int(cap * 0.85), 112 * 1024 * 1024)   # scoped limit handed to Mosaic
    return budget, limit


def _choose_cin_tile(cin, cout_pad, n_taps, itemsize, budget, cin_tile):
    """Cin (K-axis) tile: multiple of 128 (lane constraint on the activation block)
    or equal to Cin, and must divide Cin."""
    if cin_tile is not None:
        if cin_tile != cin and (cin_tile % 128 != 0 or cin % cin_tile != 0):
            raise ValueError("cin_tile must equal Cin, or be a multiple of 128 dividing Cin")
        return cin_tile
    # Keep the double-buffered weight block to <= ~1/4 of the budget so big-Cin
    # configs (v7x, 64 MiB VMEM) do not starve the activation tiles.
    per_cin = 2 * n_taps * cout_pad * itemsize
    cap = max(128, (budget // 4) // max(per_cin, 1))
    if cin <= cap:
        return cin
    best = None
    t = 128
    while t <= min(cap, cin):
        if cin % t == 0:
            best = t
        t += 128
    return best if best is not None else cin


def _choose_row_tile(h, base, n_batch, budget, fixed_bytes, per_row_bytes,
                     min_grid_steps, row_tile):
    """Output-row tile: largest multiple of `base` that fits the VMEM budget, then
    capped so batch * row_tiles >= min_grid_steps (pipelining + v7x megacore)."""
    if row_tile is not None:
        if row_tile % base != 0:
            raise ValueError(f"row_tile must be a multiple of {base}")
        return row_tile
    rows_vmem = ((budget - fixed_bytes) // max(per_row_bytes, 1)) // base * base
    rows_vmem = max(base, rows_vmem)
    rows_vmem = min(rows_vmem, _round_up(h, base))
    nh_vmem = _cdiv(h, rows_vmem)                      # tiles forced by VMEM
    nh_steps = _cdiv(min_grid_steps, max(n_batch, 1))  # tiles wanted for grid steps
    nh_max = _cdiv(h, base)                            # most tiles possible
    nh = max(nh_vmem, min(nh_steps, nh_max))
    return _round_up(_cdiv(h, nh), base)


def _atrous3x3_kernel(body_ref, halo_ref, w_ref, bias_ref, o_ref, acc_ref, *,
                      row_tile, w_out, cin_blk, cout, dil):
    """One (image, row-tile, Cin-chunk) grid step of dilated 3x3 conv + BN(eval) + ReLU.

    body_ref : (1, row_tile, w_in, cin_blk)   padded input rows [hi*T, hi*T+T)
    halo_ref : (1, 2*dil,    w_in, cin_blk)   padded input rows [hi*T+T, hi*T+T+2*dil)
    w_ref    : (3, 3, cin_blk, cout)          BN-scale-folded weights (bf16/f32)
    bias_ref : (1, cout) f32                  beta - running_mean * scale
    o_ref    : (1, row_tile, w_out, cout)
    acc_ref  : (row_tile * w_out, cout) f32   accumulator, persists across the K axis
    """
    ki = pl.program_id(2)

    @pl.when(ki == 0)
    def _init():
        # Seed the accumulator with the BN bias so the epilogue is only ReLU.
        acc_ref[...] = jnp.broadcast_to(bias_ref[...], acc_ref.shape)

    # kh taps are split between the body block and the 2*dil halo rows (both major-dim
    # slices, free); kw taps are static sublane slices of the same block (small XLU
    # shift) -> no im2col copy of the input is ever materialized.
    for kh in range(3):
        roff = kh * dil
        nb = row_tile - roff                       # output rows served by the body
        for kw in range(3):
            coff = kw * dil
            wk = w_ref[kh, kw]                     # (cin_blk, cout)
            if nb > 0:
                lhs = body_ref[0, roff:roff + nb, coff:coff + w_out, :]
                acc_ref[0:nb * w_out, :] += jnp.dot(
                    lhs.reshape(nb * w_out, cin_blk), wk,
                    preferred_element_type=jnp.float32)
            if roff > 0:
                lhs = halo_ref[0, 0:roff, coff:coff + w_out, :]
                acc_ref[nb * w_out:row_tile * w_out, :] += jnp.dot(
                    lhs.reshape(roff * w_out, cin_blk), wk,
                    preferred_element_type=jnp.float32)

    @pl.when(ki == pl.num_programs(2) - 1)
    def _finalize():
        o_ref[...] = jnp.maximum(acc_ref[...], 0.0).reshape(
            1, row_tile, w_out, cout).astype(o_ref.dtype)


def _conv1x1_kernel(x_ref, w_ref, bias_ref, o_ref, acc_ref, *,
                    row_tile, w_out, cin_blk, cout):
    """dilation==1 ASPP branch: 1x1 conv (channel matmul) + BN(eval) + ReLU."""
    ki = pl.program_id(2)

    @pl.when(ki == 0)
    def _init():
        acc_ref[...] = jnp.broadcast_to(bias_ref[...], acc_ref.shape)

    acc_ref[...] += jnp.dot(
        x_ref[0].reshape(row_tile * w_out, cin_blk), w_ref[...],
        preferred_element_type=jnp.float32)

    @pl.when(ki == pl.num_programs(2) - 1)
    def _finalize():
        o_ref[...] = jnp.maximum(acc_ref[...], 0.0).reshape(
            1, row_tile, w_out, cout).astype(o_ref.dtype)


def aspp_forward(x_nchw, w_hwio, gamma, beta, running_mean, running_var, *,
                 dilation, eps=1e-5, row_tile=None, cin_tile=None,
                 compute_dtype=jnp.bfloat16, out_dtype=jnp.float32,
                 min_grid_steps=4):
    """ASPP forward (eval mode).  dilation>1: 3x3 atrous conv, padding=dilation;
    dilation==1: 1x1 conv, padding=0.  Conv has no bias; BN uses running stats;
    Dropout(0.1) in eval mode is the identity."""
    n, cin, h, w = x_nchw.shape
    ksize = 1 if dilation == 1 else 3
    if w_hwio.shape != (ksize, ksize, cin, w_hwio.shape[-1]):
        raise ValueError(f"expected weight shape ({ksize},{ksize},{cin},Cout), got {w_hwio.shape}")
    cout = w_hwio.shape[-1]

    cdt_size = jnp.dtype(compute_dtype).itemsize
    out_size = jnp.dtype(out_dtype).itemsize
    cout_pad = _round_up(cout, 128)            # lane-dense output stores
    budget, vmem_limit = _vmem_budget_and_limit()

    # Fold BN(eval) scale into the conv weights; the remaining bias seeds the accumulator.
    scale = (gamma.astype(jnp.float32) /
             jnp.sqrt(running_var.astype(jnp.float32) + eps))
    bias = beta.astype(jnp.float32) - running_mean.astype(jnp.float32) * scale
    bias = jnp.pad(bias, (0, cout_pad - cout)).reshape(1, cout_pad)
    w_f = w_hwio.astype(jnp.float32) * scale[None, None, None, :]
    w_f = jnp.pad(w_f, ((0, 0), (0, 0), (0, 0), (0, cout_pad - cout)))
    w_k = w_f.astype(compute_dtype)            # (k, k, cin, cout_pad)

    n_taps = ksize * ksize
    cin_blk = _choose_cin_tile(cin, cout_pad, n_taps, cdt_size, budget, cin_tile)
    nk = cin // cin_blk

    w_out_al = _round_up(w, 8)                 # sublane-aligned reshapes / acc slices
    x_nhwc = jnp.transpose(x_nchw, (0, 2, 3, 1))
    # TODO(synk): callers that already keep activations in NHWC should pass them
    # directly; this transpose+pad+cast is a single fused XLA pass kept for NCHW parity.

    if dilation == 1:
        base = 8
        w_in = w_out_al
        fixed = 2 * n_taps * cin_blk * cout_pad * cdt_size + 2 * cout_pad * 4
        per_row = (2 * w_in * cin_blk * cdt_size
                   + w_out_al * cout_pad * (4 + 2 * out_size))
        rt = _choose_row_tile(h, base, n, budget, fixed, per_row, min_grid_steps, row_tile)
        nh = _cdiv(h, rt)
        h_pad = nh * rt
        x_p = jnp.pad(x_nhwc, ((0, 0), (0, h_pad - h), (0, w_in - w), (0, 0))
                      ).astype(compute_dtype)
        w_mat = w_k.reshape(cin, cout_pad)

        kernel = functools.partial(_conv1x1_kernel, row_tile=rt, w_out=w_out_al,
                                   cin_blk=cin_blk, cout=cout_pad)
        grid_spec = pltpu.PrefetchScalarGridSpec(
            num_scalar_prefetch=0,
            grid=(n, nh, nk),
            in_specs=[
                pl.BlockSpec((1, rt, w_in, cin_blk), lambda ni, hi, ki: (ni, hi, 0, ki)),
                pl.BlockSpec((cin_blk, cout_pad), lambda ni, hi, ki: (ki, 0)),
                pl.BlockSpec((1, cout_pad), lambda ni, hi, ki: (0, 0)),
            ],
            out_specs=pl.BlockSpec((1, rt, w_out_al, cout_pad),
                                   lambda ni, hi, ki: (ni, hi, 0, 0)),
            scratch_shapes=[pltpu.VMEM((rt * w_out_al, cout_pad), jnp.float32)],
        )
        args = (x_p, w_mat, bias)
    else:
        d = dilation
        base = 2 * d
        w_in = _round_up(w_out_al + 2 * d, 8)
        fixed = (2 * base * w_in * cin_blk * cdt_size          # halo rows, double-buffered
                 + 2 * n_taps * cin_blk * cout_pad * cdt_size  # weights, double-buffered
                 + 2 * cout_pad * 4)                           # bias
        per_row = (2 * w_in * cin_blk * cdt_size               # body rows, double-buffered
                   + w_out_al * cout_pad * (4 + 2 * out_size)) # acc + output (2 buffers)
        rt = _choose_row_tile(h, base, n, budget, fixed, per_row, min_grid_steps, row_tile)
        nh = _cdiv(h, rt)
        h_pad = nh * rt
        # Zero padding: d rows/cols on each side (Conv2d padding=dilation); extra
        # alignment padding is also zeros and the corresponding outputs are sliced off.
        x_p = jnp.pad(x_nhwc,
                      ((0, 0), (d, h_pad - h + d), (d, w_in - w - d), (0, 0))
                      ).astype(compute_dtype)   # (n, h_pad + 2d, w_in, cin)

        hbpt = rt // base                        # halo block-index stride
        kernel = functools.partial(_atrous3x3_kernel, row_tile=rt, w_out=w_out_al,
                                   cin_blk=cin_blk, cout=cout_pad, dil=d)
        grid_spec = pltpu.PrefetchScalarGridSpec(
            num_scalar_prefetch=0,
            grid=(n, nh, nk),
            in_specs=[
                # Body: padded rows [hi*rt, hi*rt + rt), channel chunk ki.
                pl.BlockSpec((1, rt, w_in, cin_blk),
                             lambda ni, hi, ki: (ni, hi, 0, ki)),
                # Halo: padded rows [hi*rt + rt, hi*rt + rt + 2d) via a 2d-row block.
                pl.BlockSpec((1, base, w_in, cin_blk),
                             lambda ni, hi, ki: (ni, (hi + 1) * hbpt, 0, ki)),
                pl.BlockSpec((3, 3, cin_blk, cout_pad),
                             lambda ni, hi, ki: (0, 0, ki, 0)),
                pl.BlockSpec((1, cout_pad), lambda ni, hi, ki: (0, 0)),
            ],
            out_specs=pl.BlockSpec((1, rt, w_out_al, cout_pad),
                                   lambda ni, hi, ki: (ni, hi, 0, 0)),
            scratch_shapes=[pltpu.VMEM((rt * w_out_al, cout_pad), jnp.float32)],
        )
        args = (x_p, x_p, w_k, bias)

    out = pl.pallas_call(
        kernel,
        out_shape=jax.ShapeDtypeStruct((n, h_pad, w_out_al, cout_pad), out_dtype),
        grid_spec=grid_spec,
        compiler_params=pltpu.CompilerParams(
            dimension_semantics=("parallel", "parallel", "arbitrary"),
            vmem_limit_bytes=vmem_limit,
        ),
    )(*args)

    out = out[:, :h, :w, :cout]
    # Dropout(p=0.1) in eval mode == identity.
    # TODO(synk): training-mode dropout RNG and training-mode BN batch statistics are
    # not implemented (inference/eval semantics only).
    return jnp.transpose(out, (0, 3, 1, 2))


def _reference(x_nchw, w_hwio, gamma, beta, running_mean, running_var,
               *, dilation, eps=1e-5):
    """Plain-JAX reference (lax conv + BN eval + ReLU) for verification."""
    ksize = w_hwio.shape[0]
    pad = dilation if ksize == 3 else 0
    w_oihw = jnp.transpose(w_hwio, (3, 2, 0, 1))
    y = lax.conv_general_dilated(
        x_nchw, w_oihw, window_strides=(1, 1),
        padding=[(pad, pad), (pad, pad)],
        rhs_dilation=(dilation, dilation),
        dimension_numbers=("NCHW", "OIHW", "NCHW"))
    g = gamma.reshape(1, -1, 1, 1)
    b = beta.reshape(1, -1, 1, 1)
    m = running_mean.reshape(1, -1, 1, 1)
    v = running_var.reshape(1, -1, 1, 1)
    y = (y - m) / jnp.sqrt(v + eps) * g + b
    return jnp.maximum(y, 0.0)


if __name__ == "__main__":
    def make_params(key, cin, cout, ksize):
        kw_, kg, kb, km, kv = jax.random.split(key, 5)
        fan_in = cin * ksize * ksize
        wgt = jax.random.uniform(kw_, (ksize, ksize, cin, cout), minval=-1.0,
                                 maxval=1.0, dtype=jnp.float32) / np.sqrt(fan_in)
        gamma = 1.0 + 0.1 * jax.random.normal(kg, (cout,), dtype=jnp.float32)
        beta = 0.1 * jax.random.normal(kb, (cout,), dtype=jnp.float32)
        mean = 0.05 * jax.random.normal(km, (cout,), dtype=jnp.float32)
        var = 1.0 + 0.1 * jax.random.uniform(kv, (cout,), dtype=jnp.float32)
        return wgt, gamma, beta, mean, var

    key = jax.random.PRNGKey(0)
    kx, k1, k2, k3, k4, kx2 = jax.random.split(key, 6)
    x = jax.random.normal(kx, (2, 4, 16, 16), dtype=jnp.float32)

    # 1) ASPP(4, 8, dilation=2), f32 compute path (bit-faithful check).
    w, g, b, m, v = make_params(k1, 4, 8, 3)
    fwd = jax.jit(functools.partial(aspp_forward, dilation=2, compute_dtype=jnp.float32))
    out = jax.block_until_ready(fwd(x, w, g, b, m, v))
    ref = _reference(x, w, g, b, m, v, dilation=2)
    np.testing.assert_allclose(np.asarray(out), np.asarray(ref), rtol=1e-4, atol=1e-4)

    # 2) ASPP(4, 8, dilation=3), f32 compute: odd kw offsets + H round-up (16 -> 24).
    w, g, b, m, v = make_params(k2, 4, 8, 3)
    fwd = jax.jit(functools.partial(aspp_forward, dilation=3, compute_dtype=jnp.float32))
    out = jax.block_until_ready(fwd(x, w, g, b, m, v))
    ref = _reference(x, w, g, b, m, v, dilation=3)
    np.testing.assert_allclose(np.asarray(out), np.asarray(ref), rtol=1e-4, atol=1e-4)

    # 3) ASPP(4, 8, dilation=1): 1x1-conv branch, default bf16 compute.
    w, g, b, m, v = make_params(k3, 4, 8, 1)
    fwd = jax.jit(functools.partial(aspp_forward, dilation=1))
    out = jax.block_until_ready(fwd(x, w, g, b, m, v))
    ref = _reference(x, w, g, b, m, v, dilation=1)
    np.testing.assert_allclose(np.asarray(out), np.asarray(ref), rtol=5e-2, atol=5e-2)

    # 4) Cin=256 with explicit K tiling (cin_tile=128 -> 2 K-steps), bf16 fast path.
    xk = jax.random.normal(kx2, (1, 256, 8, 8), dtype=jnp.float32)
    w, g, b, m, v = make_params(k4, 256, 8, 3)
    fwd = jax.jit(functools.partial(aspp_forward, dilation=2, cin_tile=128))
    out = jax.block_until_ready(fwd(xk, w, g, b, m, v))
    ref = _reference(xk, w, g, b, m, v, dilation=2)
    np.testing.assert_allclose(np.asarray(out), np.asarray(ref), rtol=5e-2, atol=5e-2)

    print("KERNEL_OK")
</pallas_src>

<mosaic_0001>
module attributes {stable_mosaic.version = 11 : i64} {
  func.func @_atrous3x3_kernel(%arg0: i32, %arg1: i32, %arg2: i32, %arg3: memref<1x8x24x4xf32, #tpu.memory_space<vmem>>, %arg4: memref<1x4x24x4xf32, #tpu.memory_space<vmem>>, %arg5: memref<3x3x4x128xf32, #tpu.memory_space<vmem>>, %arg6: memref<1x128xf32, #tpu.memory_space<vmem>>, %arg7: memref<1x8x16x128xf32, #tpu.memory_space<vmem>>, %arg8: memref<128x128xf32, #tpu.memory_space<vmem>>) attributes {dimension_semantics = [#tpu.dimension_semantics<parallel>, #tpu.dimension_semantics<parallel>, #tpu.dimension_semantics<arbitrary>], iteration_bounds = array<i64: 2, 2, 1>, scalar_prefetch = 0 : i64, scratch_operands = 1 : i64, tpu.core_type = #tpu.core_type<tc>, window_params = [{transform_indices = @transform_0, window_bounds = array<i64: 1, 8, 24, 4>}, {transform_indices = @transform_1, window_bounds = array<i64: 1, 4, 24, 4>}, {transform_indices = @transform_2, window_bounds = array<i64: 3, 3, 4, 128>}, {pipeline_mode = #tpu.pipeline_mode<synchronous>, transform_indices = @transform_3, window_bounds = array<i64: 1, 128>}, {transform_indices = @transform_4, window_bounds = array<i64: 1, 8, 16, 128>}]} {
    %c0_i32 = arith.constant 0 : i32
    %0 = arith.cmpi eq, %arg2, %c0_i32 : i32
    %1 = arith.extui %0 : i1 to i32
    %c0_i32_0 = arith.constant 0 : i32
    %2 = arith.cmpi ne, %1, %c0_i32_0 : i32
    scf.if %2 {
      %c0_167 = arith.constant 0 : index
      %c0_168 = arith.constant 0 : index
      %129 = vector.load %arg6[%c0_167, %c0_168] : memref<1x128xf32, #tpu.memory_space<vmem>>, vector<1x128xf32>
      %130 = vector.shape_cast %129 : vector<1x128xf32> to vector<1x128xf32>
      %131 = vector.broadcast %130 : vector<1x128xf32> to vector<128x128xf32>
      %c0_169 = arith.constant 0 : index
      %c0_170 = arith.constant 0 : index
      %132 = vector.load %arg8[%c0_169, %c0_170] : memref<128x128xf32, #tpu.memory_space<vmem>>, vector<128x128xf32>
      tpu.vector_store %arg8[%c0_169, %c0_170], %131 {strides = array<i32>} : memref<128x128xf32, #tpu.memory_space<vmem>>, vector<128x128xf32>,
    } else {
    }
    %c0 = arith.constant 0 : index
    %c0_1 = arith.constant 0 : index
    %c0_2 = arith.constant 0 : index
    %c0_3 = arith.constant 0 : index
    %3 = vector.load %arg5[%c0, %c0_1, %c0_2, %c0_3] : memref<3x3x4x128xf32, #tpu.memory_space<vmem>>, vector<1x1x4x128xf32>
    %4 = vector.shape_cast %3 : vector<1x1x4x128xf32> to vector<4x128xf32>
    %c0_4 = arith.constant 0 : index
    %c0_5 = arith.constant 0 : index
    %c0_6 = arith.constant 0 : index
    %c0_7 = arith.constant 0 : index
    %5 = vector.load %arg3[%c0_4, %c0_5, %c0_6, %c0_7] : memref<1x8x24x4xf32, #tpu.memory_space<vmem>>, vector<1x8x16x4xf32>
    %6 = vector.shape_cast %5 : vector<1x8x16x4xf32> to vector<8x16x4xf32>
    %c0_8 = arith.constant 0 : index
    %c0_9 = arith.constant 0 : index
    %7 = vector.load %arg8[%c0_8, %c0_9] : memref<128x128xf32, #tpu.memory_space<vmem>>, vector<128x128xf32>
    %8 = vector.shape_cast %6 : vector<8x16x4xf32> to vector<128x4xf32>
    %cst = arith.constant dense<0.000000e+00> : vector<128x128xf32>
    %9 = tpu.matmul %8, %4, %cst {dimension_numbers = #tpu.dot_dimension_numbers<[1], [0], [0], [1], [0, 0, 1, 1], [], []>} : vector<128x4xf32>, vector<4x128xf32>, vector<128x128xf32> -> vector<128x128xf32>
    %10 = arith.addf %7, %9 : vector<128x128xf32>
    %c0_10 = arith.constant 0 : index
    %c0_11 = arith.constant 0 : index
    %11 = vector.load %arg8[%c0_10, %c0_11] : memref<128x128xf32, #tpu.memory_space<vmem>>, vector<128x128xf32>
    tpu.vector_store %arg8[%c0_10, %c0_11], %10 {strides = array<i32>} : memref<128x128xf32, #tpu.memory_space<vmem>>, vector<128x128xf32>,
    %c0_12 = arith.constant 0 : index
    %c1 = arith.constant 1 : index
    %c0_13 = arith.constant 0 : index
    %c0_14 = arith.constant 0 : index
    %12 = vector.load %arg5[%c0_12, %c1, %c0_13, %c0_14] : memref<3x3x4x128xf32, #tpu.memory_space<vmem>>, vector<1x1x4x128xf32>
    %13 = vector.shape_cast %12 : vector<1x1x4x128xf32> to vector<4x128xf32>
    %c0_15 = arith.constant 0 : index
    %c0_16 = arith.constant 0 : index
    %c2 = arith.constant 2 : index
    %c0_17 = arith.constant 0 : index
    %14 = vector.load %arg3[%c0_15, %c0_16, %c2, %c0_17] : memref<1x8x24x4xf32, #tpu.memory_space<vmem>>, vector<1x8x16x4xf32>
    %15 = vector.shape_cast %14 : vector<1x8x16x4xf32> to vector<8x16x4xf32>
    %c0_18 = arith.constant 0 : index
    %c0_19 = arith.constant 0 : index
    %16 = vector.load %arg8[%c0_18, %c0_19] : memref<128x128xf32, #tpu.memory_space<vmem>>, vector<128x128xf32>
    %17 = vector.shape_cast %15 : vector<8x16x4xf32> to vector<128x4xf32>
    %cst_20 = arith.constant dense<0.000000e+00> : vector<128x128xf32>
    %18 = tpu.matmul %17, %13, %cst_20 {dimension_numbers = #tpu.dot_dimension_numbers<[1], [0], [0], [1], [0, 0, 1, 1], [], []>} : vector<128x4xf32>, vector<4x128xf32>, vector<128x128xf32> -> vector<128x128xf32>
    %19 = arith.addf %16, %18 : vector<128x128xf32>
    %c0_21 = arith.constant 0 : index
    %c0_22 = arith.constant 0 : index
    %20 = vector.load %arg8[%c0_21, %c0_22] : memref<128x128xf32, #tpu.memory_space<vmem>>, vector<128x128xf32>
    tpu.vector_store %arg8[%c0_21, %c0_22], %19 {strides = array<i32>} : memref<128x128xf32, #tpu.memory_space<vmem>>, vector<128x128xf32>,
    %c0_23 = arith.constant 0 : index
    %c2_24 = arith.constant 2 : index
    %c0_25 = arith.constant 0 : index
    %c0_26 = arith.constant 0 : index
    %21 = vector.load %arg5[%c0_23, %c2_24, %c0_25, %c0_26] : memref<3x3x4x128xf32, #tpu.memory_space<vmem>>, vector<1x1x4x128xf32>
    %22 = vector.shape_cast %21 : vector<1x1x4x128xf32> to vector<4x128xf32>
    %c0_27 = arith.constant 0 : index
    %c0_28 = arith.constant 0 : index
    %c4 = arith.constant 4 : index
    %c0_29 = arith.constant 0 : index
    %23 = vector.load %arg3[%c0_27, %c0_28, %c4, %c0_29] : memref<1x8x24x4xf32, #tpu.memory_space<vmem>>, vector<1x8x16x4xf32>
    %24 = vector.shape_cast %23 : vector<1x8x16x4xf32> to vector<8x16x4xf32>
    %c0_30 = arith.constant 0 : index
    %c0_31 = arith.constant 0 : index
    %25 = vector.load %arg8[%c0_30, %c0_31] : memref<128x128xf32, #tpu.memory_space<vmem>>, vector<128x128xf32>
    %26 = vector.shape_cast %24 : vector<8x16x4xf32> to vector<128x4xf32>
    %cst_32 = arith.constant dense<0.000000e+00> : vector<128x128xf32>
    %27 = tpu.matmul %26, %22, %cst_32 {dimension_numbers = #tpu.dot_dimension_numbers<[1], [0], [0], [1], [0, 0, 1, 1], [], []>} : vector<128x4xf32>, vector<4x128xf32>, vector<128x128xf32> -> vector<128x128xf32>
    %28 = arith.addf %25, %27 : vector<128x128xf32>
    %c0_33 = arith.constant 0 : index
    %c0_34 = arith.constant 0 : index
    %29 = vector.load %arg8[%c0_33, %c0_34] : memref<128x128xf32, #tpu.memory_space<vmem>>, vector<128x128xf32>
    tpu.vector_store %arg8[%c0_33, %c0_34], %28 {strides = array<i32>} : memref<128x128xf32, #tpu.memory_space<vmem>>, vector<128x128xf32>,
    %c1_35 = arith.constant 1 : index
    %c0_36 = arith.constant 0 : index
    %c0_37 = arith.constant 0 : index
    %c0_38 = arith.constant 0 : index
    %30 = vector.load %arg5[%c1_35, %c0_36, %c0_37, %c0_38] : memref<3x3x4x128xf32, #tpu.memory_space<vmem>>, vector<1x1x4x128xf32>
    %31 = vector.shape_cast %30 : vector<1x1x4x128xf32> to vector<4x128xf32>
    %c0_39 = arith.constant 0 : index
    %c2_40 = arith.constant 2 : index
    %c0_41 = arith.constant 0 : index
    %c0_42 = arith.constant 0 : index
    %32 = vector.load %arg3[%c0_39, %c2_40, %c0_41, %c0_42] : memref<1x8x24x4xf32, #tpu.memory_space<vmem>>, vector<1x6x16x4xf32>
    %33 = vector.shape_cast %32 : vector<1x6x16x4xf32> to vector<6x16x4xf32>
    %c0_43 = arith.constant 0 : index
    %c0_44 = arith.constant 0 : index
    %34 = vector.load %arg8[%c0_43, %c0_44] : memref<128x128xf32, #tpu.memory_space<vmem>>, vector<96x128xf32>
    %35 = vector.shape_cast %33 : vector<6x16x4xf32> to vector<96x4xf32>
    %cst_45 = arith.constant dense<0.000000e+00> : vector<96x128xf32>
    %36 = tpu.matmul %35, %31, %cst_45 {dimension_numbers = #tpu.dot_dimension_numbers<[1], [0], [0], [1], [0, 0, 1, 1], [], []>} : vector<96x4xf32>, vector<4x128xf32>, vector<96x128xf32> -> vector<96x128xf32>
    %37 = arith.addf %34, %36 : vector<96x128xf32>
    %c0_46 = arith.constant 0 : index
    %c0_47 = arith.constant 0 : index
    %38 = vector.load %arg8[%c0_46, %c0_47] : memref<128x128xf32, #tpu.memory_space<vmem>>, vector<96x128xf32>
    tpu.vector_store %arg8[%c0_46, %c0_47], %37 {strides = array<i32>} : memref<128x128xf32, #tpu.memory_space<vmem>>, vector<96x128xf32>,
    %c0_48 = arith.constant 0 : index
    %c0_49 = arith.constant 0 : index
    %c0_50 = arith.constant 0 : index
    %c0_51 = arith.constant 0 : index
    %39 = vector.load %arg4[%c0_48, %c0_49, %c0_50, %c0_51] : memref<1x4x24x4xf32, #tpu.memory_space<vmem>>, vector<1x2x16x4xf32>
    %40 = vector.shape_cast %39 : vector<1x2x16x4xf32> to vector<2x16x4xf32>
    %c96 = arith.constant 96 : index
    %c0_52 = arith.constant 0 : index
    %41 = vector.load %arg8[%c96, %c0_52] : memref<128x128xf32, #tpu.memory_space<vmem>>, vector<32x128xf32>
    %42 = vector.shape_cast %40 : vector<2x16x4xf32> to vector<32x4xf32>
    %cst_53 = arith.constant dense<0.000000e+00> : vector<32x128xf32>
    %43 = tpu.matmul %42, %31, %cst_53 {dimension_numbers = #tpu.dot_dimension_numbers<[1], [0], [0], [1], [0, 0, 1, 1], [], []>} : vector<32x4xf32>, vector<4x128xf32>, vector<32x128xf32> -> vector<32x128xf32>
    %44 = arith.addf %41, %43 : vector<32x128xf32>
    %c96_54 = arith.constant 96 : index
    %c0_55 = arith.constant 0 : index
    %45 = vector.load %arg8[%c96_54, %c0_55] : memref<128x128xf32, #tpu.memory_space<vmem>>, vector<32x128xf32>
    tpu.vector_store %arg8[%c96_54, %c0_55], %44 {strides = array<i32>} : memref<128x128xf32, #tpu.memory_space<vmem>>, vector<32x128xf32>,
    %c1_56 = arith.constant 1 : index
    %c1_57 = arith.constant 1 : index
    %c0_58 = arith.constant 0 : index
    %c0_59 = arith.constant 0 : index
    %46 = vector.load %arg5[%c1_56, %c1_57, %c0_58, %c0_59] : memref<3x3x4x128xf32, #tpu.memory_space<vmem>>, vector<1x1x4x128xf32>
    %47 = vector.shape_cast %46 : vector<1x1x4x128xf32> to vector<4x128xf32>
    %c0_60 = arith.constant 0 : index
    %c2_61 = arith.constant 2 : index
    %c2_62 = arith.constant 2 : index
    %c0_63 = arith.constant 0 : index
    %48 = vector.load %arg3[%c0_60, %c2_61, %c2_62, %c0_63] : memref<1x8x24x4xf32, #tpu.memory_space<vmem>>, vector<1x6x16x4xf32>
    %49 = vector.shape_cast %48 : vector<1x6x16x4xf32> to vector<6x16x4xf32>
    %c0_64 = arith.constant 0 : index
    %c0_65 = arith.constant 0 : index
    %50 = vector.load %arg8[%c0_64, %c0_65] : memref<128x128xf32, #tpu.memory_space<vmem>>, vector<96x128xf32>
    %51 = vector.shape_cast %49 : vector<6x16x4xf32> to vector<96x4xf32>
    %cst_66 = arith.constant dense<0.000000e+00> : vector<96x128xf32>
    %52 = tpu.matmul %51, %47, %cst_66 {dimension_numbers = #tpu.dot_dimension_numbers<[1], [0], [0], [1], [0, 0, 1, 1], [], []>} : vector<96x4xf32>, vector<4x128xf32>, vector<96x128xf32> -> vector<96x128xf32>
    %53 = arith.addf %50, %52 : vector<96x128xf32>
    %c0_67 = arith.constant 0 : index
    %c0_68 = arith.constant 0 : index
    %54 = vector.load %arg8[%c0_67, %c0_68] : memref<128x128xf32, #tpu.memory_space<vmem>>, vector<96x128xf32>
    tpu.vector_store %arg8[%c0_67, %c0_68], %53 {strides = array<i32>} : memref<128x128xf32, #tpu.memory_space<vmem>>, vector<96x128xf32>,
    %c0_69 = arith.constant 0 : index
    %c0_70 = arith.constant 0 : index
    %c2_71 = arith.constant 2 : index
    %c0_72 = arith.constant 0 : index
    %55 = vector.load %arg4[%c0_69, %c0_70, %c2_71, %c0_72] : memref<1x4x24x4xf32, #tpu.memory_space<vmem>>, vector<1x2x16x4xf32>
    %56 = vector.shape_cast %55 : vector<1x2x16x4xf32> to vector<2x16x4xf32>
    %c96_73 = arith.constant 96 : index
    %c0_74 = arith.constant 0 : index
    %57 = vector.load %arg8[%c96_73, %c0_74] : memref<128x128xf32, #tpu.memory_space<vmem>>, vector<32x128xf32>
    %58 = vector.shape_cast %56 : vector<2x16x4xf32> to vector<32x4xf32>
    %cst_75 = arith.constant dense<0.000000e+00> : vector<32x128xf32>
    %59 = tpu.matmul %58, %47, %cst_75 {dimension_numbers = #tpu.dot_dimension_numbers<[1], [0], [0], [1], [0, 0, 1, 1], [], []>} : vector<32x4xf32>, vector<4x128xf32>, vector<32x128xf32> -> vector<32x128xf32>
    %60 = arith.addf %57, %59 : vector<32x128xf32>
    %c96_76 = arith.constant 96 : index
    %c0_77 = arith.constant 0 : index
    %61 = vector.load %arg8[%c96_76, %c0_77] : memref<128x128xf32, #tpu.memory_space<vmem>>, vector<32x128xf32>
    tpu.vector_store %arg8[%c96_76, %c0_77], %60 {strides = array<i32>} : memref<128x128xf32, #tpu.memory_space<vmem>>, vector<32x128xf32>,
    %c1_78 = arith.constant 1 : index
    %c2_79 = arith.constant 2 : index
    %c0_80 = arith.constant 0 : index
    %c0_81 = arith.constant 0 : index
    %62 = vector.load %arg5[%c1_78, %c2_79, %c0_80, %c0_81] : memref<3x3x4x128xf32, #tpu.memory_space<vmem>>, vector<1x1x4x128xf32>
    %63 = vector.shape_cast %62 : vector<1x1x4x128xf32> to vector<4x128xf32>
    %c0_82 = arith.constant 0 : index
    %c2_83 = arith.constant 2 : index
    %c4_84 = arith.constant 4 : index
    %c0_85 = arith.constant 0 : index
    %64 = vector.load %arg3[%c0_82, %c2_83, %c4_84, %c0_85] : memref<1x8x24x4xf32, #tpu.memory_space<vmem>>, vector<1x6x16x4xf32>
    %65 = vector.shape_cast %64 : vector<1x6x16x4xf32> to vector<6x16x4xf32>
    %c0_86 = arith.constant 0 : index
    %c0_87 = arith.constant 0 : index
    %66 = vector.load %arg8[%c0_86, %c0_87] : memref<128x128xf32, #tpu.memory_space<vmem>>, vector<96x128xf32>
    %67 = vector.shape_cast %65 : vector<6x16x4xf32> to vector<96x4xf32>
    %cst_88 = arith.constant dense<0.000000e+00> : vector<96x128xf32>
    %68 = tpu.matmul %67, %63, %cst_88 {dimension_numbers = #tpu.dot_dimension_numbers<[1], [0], [0], [1], [0, 0, 1, 1], [], []>} : vector<96x4xf32>, vector<4x128xf32>, vector<96x128xf32> -> vector<96x128xf32>
    %69 = arith.addf %66, %68 : vector<96x128xf32>
    %c0_89 = arith.constant 0 : index
    %c0_90 = arith.constant 0 : index
    %70 = vector.load %arg8[%c0_89, %c0_90] : memref<128x128xf32, #tpu.memory_space<vmem>>, vector<96x128xf32>
    tpu.vector_store %arg8[%c0_89, %c0_90], %69 {strides = array<i32>} : memref<128x128xf32, #tpu.memory_space<vmem>>, vector<96x128xf32>,
    %c0_91 = arith.constant 0 : index
    %c0_92 = arith.constant 0 : index
    %c4_93 = arith.constant 4 : index
    %c0_94 = arith.constant 0 : index
    %71 = vector.load %arg4[%c0_91, %c0_92, %c4_93, %c0_94] : memref<1x4x24x4xf32, #tpu.memory_space<vmem>>, vector<1x2x16x4xf32>
    %72 = vector.shape_cast %71 : vector<1x2x16x4xf32> to vector<2x16x4xf32>
    %c96_95 = arith.constant 96 : index
    %c0_96 = arith.constant 0 : index
    %73 = vector.load %arg8[%c96_95, %c0_96] : memref<128x128xf32, #tpu.memory_space<vmem>>, vector<32x128xf32>
    %74 = vector.shape_cast %72 : vector<2x16x4xf32> to vector<32x4xf32>
    %cst_97 = arith.constant dense<0.000000e+00> : vector<32x128xf32>
    %75 = tpu.matmul %74, %63, %cst_97 {dimension_numbers = #tpu.dot_dimension_numbers<[1], [0], [0], [1], [0, 0, 1, 1], [], []>} : vector<32x4xf32>, vector<4x128xf32>, vector<32x128xf32> -> vector<32x128xf32>
    %76 = arith.addf %73, %75 : vector<32x128xf32>
    %c96_98 = arith.constant 96 : index
    %c0_99 = arith.constant 0 : index
    %77 = vector.load %arg8[%c96_98, %c0_99] : memref<128x128xf32, #tpu.memory_space<vmem>>, vector<32x128xf32>
    tpu.vector_store %arg8[%c96_98, %c0_99], %76 {strides = array<i32>} : memref<128x128xf32, #tpu.memory_space<vmem>>, vector<32x128xf32>,
    %c2_100 = arith.constant 2 : index
    %c0_101 = arith.constant 0 : index
    %c0_102 = arith.constant 0 : index
    %c0_103 = arith.constant 0 : index
    %78 = vector.load %arg5[%c2_100, %c0_101, %c0_102, %c0_103] : memref<3x3x4x128xf32, #tpu.memory_space<vmem>>, vector<1x1x4x128xf32>
    %79 = vector.shape_cast %78 : vector<1x1x4x128xf32> to vector<4x128xf32>
    %c0_104 = arith.constant 0 : index
    %c4_105 = arith.constant 4 : index
    %c0_106 = arith.constant 0 : index
    %c0_107 = arith.constant 0 : index
    %80 = vector.load %arg3[%c0_104, %c4_105, %c0_106, %c0_107] : memref<1x8x24x4xf32, #tpu.memory_space<vmem>>, vector<1x4x16x4xf32>
    %81 = vector.shape_cast %80 : vector<1x4x16x4xf32> to vector<4x16x4xf32>
    %c0_108 = arith.constant 0 : index
    %c0_109 = arith.constant 0 : index
    %82 = vector.load %arg8[%c0_108, %c0_109] : memref<128x128xf32, #tpu.memory_space<vmem>>, vector<64x128xf32>
    %83 = vector.shape_cast %81 : vector<4x16x4xf32> to vector<64x4xf32>
    %cst_110 = arith.constant dense<0.000000e+00> : vector<64x128xf32>
    %84 = tpu.matmul %83, %79, %cst_110 {dimension_numbers = #tpu.dot_dimension_numbers<[1], [0], [0], [1], [0, 0, 1, 1], [], []>} : vector<64x4xf32>, vector<4x128xf32>, vector<64x128xf32> -> vector<64x128xf32>
    %85 = arith.addf %82, %84 : vector<64x128xf32>
    %c0_111 = arith.constant 0 : index
    %c0_112 = arith.constant 0 : index
    %86 = vector.load %arg8[%c0_111, %c0_112] : memref<128x128xf32, #tpu.memory_space<vmem>>, vector<64x128xf32>
    tpu.vector_store %arg8[%c0_111, %c0_112], %85 {strides = array<i32>} : memref<128x128xf32, #tpu.memory_space<vmem>>, vector<64x128xf32>,
    %c0_113 = arith.constant 0 : index
    %c0_114 = arith.constant 0 : index
    %c0_115 = arith.constant 0 : index
    %c0_116 = arith.constant 0 : index
    %87 = vector.load %arg4[%c0_113, %c0_114, %c0_115, %c0_116] : memref<1x4x24x4xf32, #tpu.memory_space<vmem>>, vector<1x4x16x4xf32>
    %88 = vector.shape_cast %87 : vector<1x4x16x4xf32> to vector<4x16x4xf32>
    %c64 = arith.constant 64 : index
    %c0_117 = arith.constant 0 : index
    %89 = vector.load %arg8[%c64, %c0_117] : memref<128x128xf32, #tpu.memory_space<vmem>>, vector<64x128xf32>
    %90 = vector.shape_cast %88 : vector<4x16x4xf32> to vector<64x4xf32>
    %cst_118 = arith.constant dense<0.000000e+00> : vector<64x128xf32>
    %91 = tpu.matmul %90, %79, %cst_118 {dimension_numbers = #tpu.dot_dimension_numbers<[1], [0], [0], [1], [0, 0, 1, 1], [], []>} : vector<64x4xf32>, vector<4x128xf32>, vector<64x128xf32> -> vector<64x128xf32>
    %92 = arith.addf %89, %91 : vector<64x128xf32>
    %c64_119 = arith.constant 64 : index
    %c0_120 = arith.constant 0 : index
    %93 = vector.load %arg8[%c64_119, %c0_120] : memref<128x128xf32, #tpu.memory_space<vmem>>, vector<64x128xf32>
    tpu.vector_store %arg8[%c64_119, %c0_120], %92 {strides = array<i32>} : memref<128x128xf32, #tpu.memory_space<vmem>>, vector<64x128xf32>,
    %c2_121 = arith.constant 2 : index
    %c1_122 = arith.constant 1 : index
    %c0_123 = arith.constant 0 : index
    %c0_124 = arith.constant 0 : index
    %94 = vector.load %arg5[%c2_121, %c1_122, %c0_123, %c0_124] : memref<3x3x4x128xf32, #tpu.memory_space<vmem>>, vector<1x1x4x128xf32>
    %95 = vector.shape_cast %94 : vector<1x1x4x128xf32> to vector<4x128xf32>
    %c0_125 = arith.constant 0 : index
    %c4_126 = arith.constant 4 : index
    %c2_127 = arith.constant 2 : index
    %c0_128 = arith.constant 0 : index
    %96 = vector.load %arg3[%c0_125, %c4_126, %c2_127, %c0_128] : memref<1x8x24x4xf32, #tpu.memory_space<vmem>>, vector<1x4x16x4xf32>
    %97 = vector.shape_cast %96 : vector<1x4x16x4xf32> to vector<4x16x4xf32>
    %c0_129 = arith.constant 0 : index
    %c0_130 = arith.constant 0 : index
    %98 = vector.load %arg8[%c0_129, %c0_130] : memref<128x128xf32, #tpu.memory_space<vmem>>, vector<64x128xf32>
    %99 = vector.shape_cast %97 : vector<4x16x4xf32> to vector<64x4xf32>
    %cst_131 = arith.constant dense<0.000000e+00> : vector<64x128xf32>
    %100 = tpu.matmul %99, %95, %cst_131 {dimension_numbers = #tpu.dot_dimension_numbers<[1], [0], [0], [1], [0, 0, 1, 1], [], []>} : vector<64x4xf32>, vector<4x128xf32>, vector<64x128xf32> -> vector<64x128xf32>
    %101 = arith.addf %98, %100 : vector<64x128xf32>
    %c0_132 = arith.constant 0 : index
    %c0_133 = arith.constant 0 : index
    %102 = vector.load %arg8[%c0_132, %c0_133] : memref<128x128xf32, #tpu.memory_space<vmem>>, vector<64x128xf32>
    tpu.vector_store %arg8[%c0_132, %c0_133], %101 {strides = array<i32>} : memref<128x128xf32, #tpu.memory_space<vmem>>, vector<64x128xf32>,
    %c0_134 = arith.constant 0 : index
    %c0_135 = arith.constant 0 : index
    %c2_136 = arith.constant 2 : index
    %c0_137 = arith.constant 0 : index
    %103 = vector.load %arg4[%c0_134, %c0_135, %c2_136, %c0_137] : memref<1x4x24x4xf32, #tpu.memory_space<vmem>>, vector<1x4x16x4xf32>
    %104 = vector.shape_cast %103 : vector<1x4x16x4xf32> to vector<4x16x4xf32>
    %c64_138 = arith.constant 64 : index
    %c0_139 = arith.constant 0 : index
    %105 = vector.load %arg8[%c64_138, %c0_139] : memref<128x128xf32, #tpu.memory_space<vmem>>, vector<64x128xf32>
    %106 = vector.shape_cast %104 : vector<4x16x4xf32> to vector<64x4xf32>
    %cst_140 = arith.constant dense<0.000000e+00> : vector<64x128xf32>
    %107 = tpu.matmul %106, %95, %cst_140 {dimension_numbers = #tpu.dot_dimension_numbers<[1], [0], [0], [1], [0, 0, 1, 1], [], []>} : vector<64x4xf32>, vector<4x128xf32>, vector<64x128xf32> -> vector<64x128xf32>
    %108 = arith.addf %105, %107 : vector<64x128xf32>
    %c64_141 = arith.constant 64 : index
    %c0_142 = arith.constant 0 : index
    %109 = vector.load %arg8[%c64_141, %c0_142] : memref<128x128xf32, #tpu.memory_space<vmem>>, vector<64x128xf32>
    tpu.vector_store %arg8[%c64_141, %c0_142], %108 {strides = array<i32>} : memref<128x128xf32, #tpu.memory_space<vmem>>, vector<64x128xf32>,
    %c2_143 = arith.constant 2 : index
    %c2_144 = arith.constant 2 : index
    %c0_145 = arith.constant 0 : index
    %c0_146 = arith.constant 0 : index
    %110 = vector.load %arg5[%c2_143, %c2_144, %c0_145, %c0_146] : memref<3x3x4x128xf32, #tpu.memory_space<vmem>>, vector<1x1x4x128xf32>
    %111 = vector.shape_cast %110 : vector<1x1x4x128xf32> to vector<4x128xf32>
    %c0_147 = arith.constant 0 : index
    %c4_148 = arith.constant 4 : index
    %c4_149 = arith.constant 4 : index
    %c0_150 = arith.constant 0 : index
    %112 = vector.load %arg3[%c0_147, %c4_148, %c4_149, %c0_150] : memref<1x8x24x4xf32, #tpu.memory_space<vmem>>, vector<1x4x16x4xf32>
    %113 = vector.shape_cast %112 : vector<1x4x16x4xf32> to vector<4x16x4xf32>
    %c0_151 = arith.constant 0 : index
    %c0_152 = arith.constant 0 : index
    %114 = vector.load %arg8[%c0_151, %c0_152] : memref<128x128xf32, #tpu.memory_space<vmem>>, vector<64x128xf32>
    %115 = vector.shape_cast %113 : vector<4x16x4xf32> to vector<64x4xf32>
    %cst_153 = arith.constant dense<0.000000e+00> : vector<64x128xf32>
    %116 = tpu.matmul %115, %111, %cst_153 {dimension_numbers = #tpu.dot_dimension_numbers<[1], [0], [0], [1], [0, 0, 1, 1], [], []>} : vector<64x4xf32>, vector<4x128xf32>, vector<64x128xf32> -> vector<64x128xf32>
    %117 = arith.addf %114, %116 : vector<64x128xf32>
    %c0_154 = arith.constant 0 : index
    %c0_155 = arith.constant 0 : index
    %118 = vector.load %arg8[%c0_154, %c0_155] : memref<128x128xf32, #tpu.memory_space<vmem>>, vector<64x128xf32>
    tpu.vector_store %arg8[%c0_154, %c0_155], %117 {strides = array<i32>} : memref<128x128xf32, #tpu.memory_space<vmem>>, vector<64x128xf32>,
    %c0_156 = arith.constant 0 : index
    %c0_157 = arith.constant 0 : index
    %c4_158 = arith.constant 4 : index
    %c0_159 = arith.constant 0 : index
    %119 = vector.load %arg4[%c0_156, %c0_157, %c4_158, %c0_159] : memref<1x4x24x4xf32, #tpu.memory_space<vmem>>, vector<1x4x16x4xf32>
    %120 = vector.shape_cast %119 : vector<1x4x16x4xf32> to vector<4x16x4xf32>
    %c64_160 = arith.constant 64 : index
    %c0_161 = arith.constant 0 : index
    %121 = vector.load %arg8[%c64_160, %c0_161] : memref<128x128xf32, #tpu.memory_space<vmem>>, vector<64x128xf32>
    %122 = vector.shape_cast %120 : vector<4x16x4xf32> to vector<64x4xf32>
    %cst_162 = arith.constant dense<0.000000e+00> : vector<64x128xf32>
    %123 = tpu.matmul %122, %111, %cst_162 {dimension_numbers = #tpu.dot_dimension_numbers<[1], [0], [0], [1], [0, 0, 1, 1], [], []>} : vector<64x4xf32>, vector<4x128xf32>, vector<64x128xf32> -> vector<64x128xf32>
    %124 = arith.addf %121, %123 : vector<64x128xf32>
    %c64_163 = arith.constant 64 : index
    %c0_164 = arith.constant 0 : index
    %125 = vector.load %arg8[%c64_163, %c0_164] : memref<128x128xf32, #tpu.memory_space<vmem>>, vector<64x128xf32>
    tpu.vector_store %arg8[%c64_163, %c0_164], %124 {strides = array<i32>} : memref<128x128xf32, #tpu.memory_space<vmem>>, vector<64x128xf32>,
    %c0_i32_165 = arith.constant 0 : i32
    %126 = arith.cmpi eq, %arg2, %c0_i32_165 : i32
    %127 = arith.extui %126 : i1 to i32
    %c0_i32_166 = arith.constant 0 : i32
    %128 = arith.cmpi ne, %127, %c0_i32_166 : i32
    scf.if %128 {
      %c0_167 = arith.constant 0 : index
      %c0_168 = arith.constant 0 : index
      %129 = vector.load %arg8[%c0_167, %c0_168] : memref<128x128xf32, #tpu.memory_space<vmem>>, vector<128x128xf32>
      %cst_169 = arith.constant 0.000000e+00 : f32
      %130 = vector.broadcast %cst_169 : f32 to vector<128x128xf32>
      %131 = arith.maximumf %129, %130 : vector<128x128xf32>
      %132 = vector.shape_cast %131 : vector<128x128xf32> to vector<1x8x16x128xf32>
      %c0_170 = arith.constant 0 : index
      %c0_171 = arith.constant 0 : index
      %c0_172 = arith.constant 0 : index
      %c0_173 = arith.constant 0 : index
      %133 = vector.load %arg7[%c0_170, %c0_171, %c0_172, %c0_173] : memref<1x8x16x128xf32, #tpu.memory_space<vmem>>, vector<1x8x16x128xf32>
      tpu.vector_store %arg7[%c0_170, %c0_171, %c0_172, %c0_173], %132 {strides = array<i32>} : memref<1x8x16x128xf32, #tpu.memory_space<vmem>>, vector<1x8x16x128xf32>,
    } else {
    }
    return
  }
  func.func @transform_0(%arg0: i32, %arg1: i32, %arg2: i32) -> (i32, i32, i32, i32) {
    %c0_i32 = arith.constant 0 : i32
    %c0_i32_0 = arith.constant 0 : i32
    return %arg0, %arg1, %c0_i32, %arg2 : i32, i32, i32, i32
  }
  func.func @transform_1(%arg0: i32, %arg1: i32, %arg2: i32) -> (i32, i32, i32, i32) {
    %c1_i32 = arith.constant 1 : i32
    %0 = arith.addi %arg1, %c1_i32 : i32
    %c2_i32 = arith.constant 2 : i32
    %1 = arith.muli %0, %c2_i32 : i32
    %c0_i32 = arith.constant 0 : i32
    %c0_i32_0 = arith.constant 0 : i32
    return %arg0, %1, %c0_i32, %arg2 : i32, i32, i32, i32
  }
  func.func @transform_2(%arg0: i32, %arg1: i32, %arg2: i32) -> (i32, i32, i32, i32) {
    %c0_i32 = arith.constant 0 : i32
    %c0_i32_0 = arith.constant 0 : i32
    %c0_i32_1 = arith.constant 0 : i32
    %c0_i32_2 = arith.constant 0 : i32
    return %c0_i32, %c0_i32_0, %arg2, %c0_i32_1 : i32, i32, i32, i32
  }
  func.func @transform_3(%arg0: i32, %arg1: i32, %arg2: i32) -> (i32, i32) {
    %c0_i32 = arith.constant 0 : i32
    %c0_i32_0 = arith.constant 0 : i32
    %c0_i32_1 = arith.constant 0 : i32
    return %c0_i32, %c0_i32_0 : i32, i32
  }
  func.func @transform_4(%arg0: i32, %arg1: i32, %arg2: i32) -> (i32, i32, i32, i32) {
    %c0_i32 = arith.constant 0 : i32
    %c0_i32_0 = arith.constant 0 : i32
    %c0_i32_1 = arith.constant 0 : i32
    return %arg0, %arg1, %c0_i32, %c0_i32_0 : i32, i32, i32, i32
  }
}

</mosaic_0001>

<llo_original>
// kernel: aspp_forward.1
$region0: #{aspp_forward.1}
  #allocation0 [shape = 'u32[]', space=smem, size = 0x4, offset = 0x4, fixed_abs, tag = 'smem constant byte address 0x4 - core index']
  #allocation1 [shape = 'u32[72,128]{1,0:T(1,128)}', space=vmem, size = 0x9000, scoped, tag = 'internal scratch']
  #allocation2 [shape = 'f32[128,128]{1,0:T(8,128)}', space=vmem, size = 0x10000, scoped, tag = 'scratch operand']
  %s0 = inlined_call_operand.vmem [shape: f32[2,20,24,4], index: 0, kind: input, shape index: {}, may-alias: {0,1}]
  %s1 = inlined_call_operand.vmem [shape: f32[2,20,24,4], index: 1, kind: input, shape index: {}, may-alias: {0,1}]
  %s2 = inlined_call_operand.vmem [shape: f32[3,3,4,128], index: 2, kind: input, shape index: {}]
  %s3 = inlined_call_operand.vmem [shape: f32[1,128], index: 3, kind: input, shape index: {}]
  %s4 = inlined_call_operand.vmem [shape: f32[2,16,16,128], index: 4, kind: output, shape index: {}]
  %s5 = sld [smem:[#allocation0]]
  $region57: #{aspp_forward.1} parent=0
    _
  %s7 = ssub.s32 1, %s5
  %s8 = scalar_select 0, %s7, %s5
  loop: start=0, step=1, limit=6
  $region2: #{aspp_forward.1} parent=0 // loop_pre_header
    _
  $region3: #{aspp_forward.1} parent=0 // loop_header
    %s10 = sphi 0, %s14
    %p11 = scmp.ge.s32.totalorder %s10, 6
    %s17 = sphi 0, %s36
    %s18 = sphi 0, %s32
    %s19 = sphi 0, %s28
    %s20 = sphi 0, %s17
    %s21 = sphi 0, %s18
    %s22 = sphi 0, %s19
    %s23 = sphi 0, %s20
    %s24 = sphi 0, %s21
    %s25 = sphi 0, %s22
    %s43 = sphi 0, %s45
    %s46 = sphi 0, %s43
    %s47 = sphi 0, %s46
    %s63 = sphi 0, %s47
    %s77 = sphi 0, %s79
    %s80 = sphi 0, %s77
    %s81 = sphi 0, %s80
    %s97 = sphi 0, %s81
    %s103 = sphi 0, %s105
    %s106 = sphi 0, %s103
    %s107 = sphi 0, %s106
    %s123 = sphi 0, %s107
    %s127 = sphi 0, %s127
    %s129 = sphi 0, %s127
    %s130 = sphi 0, %s129
    %s144 = sphi 0, %s130
    %s152 = sphi 0, %s154
    %s155 = sphi 0, %s152
    %s156 = sphi 0, %s155
    %s172 = sphi 0, %s156
  $region4: #{aspp_forward.1} parent=0 // loop_header_branch
    %13 = sbr.rel (%p11) target = $region8
  $region5: #{aspp_forward.1} parent=0 // loop_body
    %s15 = ssub.s32 %s10, 1
    %s16 = ssub.s32 %s10, 2
    %s26 = sadd.s32 1, %s19
    %p27 = scmp.ge.s32.totalorder %s26, 1
    %s28 = scalar_select %p27, 0, %s26
    %s29 = sadd.s32 1, %s18
    %s30 = scalar_select %p27, %s29, %s18
    %p31 = scmp.ge.s32.totalorder %s30, 2
    %s32 = scalar_select %p31, 0, %s30
    %s33 = sadd.s32 1, %s17
    %s34 = scalar_select %p31, %s33, %s17
    %p35 = scmp.ge.s32.totalorder %s34, 2
    %s36 = scalar_select %p35, 0, %s34
    %s37 = ssub.s32 %s17, %s36
    %s38 = ssub.s32 %s18, %s32
    %s39 = sor.u32 %s37, %s38
    %s40 = ssub.s32 %s19, %s28
    %s41 = sor.u32 %s39, %s40
    %p42 = scmp.eq.s32.totalorder %s41, 0
    %s44 = sadd.s32 %s43, 1
    %s45 = scalar_select %p42, %s43, %s44
    %p48 = pneg %p42
    %p49 = scmp.eq.s32.totalorder %s10, 3
    %p50 = por %p48, %p49
    %p51 = scmp.ne.s32.totalorder %s43, %s46
    %p52 = scmp.eq.s32.totalorder %s10, 0
    %p53 = por %p51, %p52
    %p54 = scmp.ne.s32.totalorder %s43, %s46
    %p55 = scmp.eq.s32.totalorder %s15, 3
    %p56 = por %p54, %p55
    %p57 = scmp.ne.s32.totalorder %s46, %s47
    %p58 = scmp.eq.s32.totalorder %s15, 0
    %p59 = por %p57, %p58
    %p60 = scmp.ne.s32.totalorder %s46, %s47
    %p61 = scmp.eq.s32.totalorder %s16, 3
    %p62 = por %p60, %p61
    %p64 = scmp.ne.s32.totalorder %s47, %s63
    %p65 = scmp.eq.s32.totalorder %s16, 0
    %p66 = por %p64, %p65
    %s67 = sadd.s32 %s18, 1
    %s68 = smul.u32 %s67, 2
    %s69 = sadd.s32 %s32, 1
    %s70 = smul.u32 %s69, 2
    %s71 = ssub.s32 %s17, %s36
    %s72 = ssub.s32 %s68, %s70
    %s73 = sor.u32 %s71, %s72
    %s74 = ssub.s32 %s19, %s28
    %s75 = sor.u32 %s73, %s74
    %p76 = scmp.eq.s32.totalorder %s75, 0
    %s78 = sadd.s32 %s77, 1
    %s79 = scalar_select %p76, %s77, %s78
    %p82 = pneg %p76
    %p83 = scmp.eq.s32.totalorder %s10, 3
    %p84 = por %p82, %p83
    %p85 = scmp.ne.s32.totalorder %s77, %s80
    %p86 = scmp.eq.s32.totalorder %s10, 0
    %p87 = por %p85, %p86
    %p88 = scmp.ne.s32.totalorder %s77, %s80
    %p89 = scmp.eq.s32.totalorder %s15, 3
    %p90 = por %p88, %p89
    %p91 = scmp.ne.s32.totalorder %s80, %s81
    %p92 = scmp.eq.s32.totalorder %s15, 0
    %p93 = por %p91, %p92
    %p94 = scmp.ne.s32.totalorder %s80, %s81
    %p95 = scmp.eq.s32.totalorder %s16, 3
    %p96 = por %p94, %p95
    %p98 = scmp.ne.s32.totalorder %s81, %s97
    %p99 = scmp.eq.s32.totalorder %s16, 0
    %p100 = por %p98, %p99
    %s101 = ssub.s32 %s19, %s28
    %p102 = scmp.eq.s32.totalorder %s101, 0
    %s104 = sadd.s32 %s103, 1
    %s105 = scalar_select %p102, %s103, %s104
    %p108 = pneg %p102
    %p109 = scmp.eq.s32.totalorder %s10, 3
    %p110 = por %p108, %p109
    %p111 = scmp.ne.s32.totalorder %s103, %s106
    %p112 = scmp.eq.s32.totalorder %s10, 0
    %p113 = por %p111, %p112
    %p114 = scmp.ne.s32.totalorder %s103, %s106
    %p115 = scmp.eq.s32.totalorder %s15, 3
    %p116 = por %p114, %p115
    %p117 = scmp.ne.s32.totalorder %s106, %s107
    %p118 = scmp.eq.s32.totalorder %s15, 0
    %p119 = por %p117, %p118
    %p120 = scmp.ne.s32.totalorder %s106, %s107
    %p121 = scmp.eq.s32.totalorder %s16, 3
    %p122 = por %p120, %p121
    %p124 = scmp.ne.s32.totalorder %s107, %s123
    %p125 = scmp.eq.s32.totalorder %s16, 0
    %p126 = por %p124, %p125
    %s128 = sadd.s32 %s127, 1
    %p131 = scmp.eq.s32.totalorder %s10, 3
    %p132 = scmp.ne.s32.totalorder %s127, %s129
    %p133 = scmp.eq.s32.totalorder %s10, 0
    %p134 = por %p132, %p133
    %p135 = scmp.ne.s32.totalorder %s127, %s129
    %p136 = scmp.eq.s32.totalorder %s15, 3
    %p137 = por %p135, %p136
    %p138 = scmp.ne.s32.totalorder %s129, %s130
    %p139 = scmp.eq.s32.totalorder %s15, 0
    %p140 = por %p138, %p139
    %p141 = scmp.ne.s32.totalorder %s129, %s130
    %p142 = scmp.eq.s32.totalorder %s16, 3
    %p143 = por %p141, %p142
    %p145 = scmp.ne.s32.totalorder %s130, %s144
    %p146 = scmp.eq.s32.totalorder %s16, 0
    %p147 = por %p145, %p146
    %s148 = ssub.s32 %s17, %s36
    %s149 = ssub.s32 %s18, %s32
    %s150 = sor.u32 %s148, %s149
    %p151 = scmp.eq.s32.totalorder %s150, 0
    %s153 = sadd.s32 %s152, 1
    %s154 = scalar_select %p151, %s152, %s153
    %p157 = pneg %p151
    %p158 = scmp.eq.s32.totalorder %s10, 3
    %p159 = por %p157, %p158
    %p160 = scmp.ne.s32.totalorder %s152, %s155
    %p161 = scmp.eq.s32.totalorder %s10, 0
    %p162 = por %p160, %p161
    %p163 = scmp.ne.s32.totalorder %s152, %s155
    %p164 = scmp.eq.s32.totalorder %s15, 3
    %p165 = por %p163, %p164
    %p166 = scmp.ne.s32.totalorder %s155, %s156
    %p167 = scmp.eq.s32.totalorder %s15, 0
    %p168 = por %p166, %p167
    %p169 = scmp.ne.s32.totalorder %s155, %s156
    %p170 = scmp.eq.s32.totalorder %s16, 3
    %p171 = por %p169, %p170
    %p173 = scmp.ne.s32.totalorder %s156, %s172
    %p174 = scmp.eq.s32.totalorder %s16, 0
    %p175 = por %p173, %p174
    %p176 = scmp.le.s32.totalorder 1, %s10
    %p177 = scmp.lt.s32.totalorder %s10, 5
    %p178 = pnand %p176, %p177
    %p179 = pneg %p178
    // Predicated region
    $region9: #{aspp_forward.1} parent=5 // pred_check
      _
    $region10: #{aspp_forward.1} parent=5 // pred_check_branch
      %181 = sbr.rel (%p178) target = $region12
    $region11: #{aspp_forward.1} parent=5 // pred_region
      %s182 = ssub.s32 %s10, 1
      // Predicated region
      $region13: #{aspp_forward.1} parent=11 // pred_check
        %p183 = pneg %p119
      $region14: #{aspp_forward.1} parent=11 // pred_check_branch
        %185 = sbr.rel (%p183) target = $region16
      $region15: #{aspp_forward.1} parent=11 // pred_region
        %p186 = scmp.lt.s32.totalorder %s22, 0
        %s187 = scalar_select %p186, %s22, 0
        %s188 = smul.addr %s187, 4
        %s189 = scalar_lea.vmem %s2, %s188
      $region16: #{aspp_forward.1} parent=11 // pred_fallthru
        _
      // Predicated region
      $region17: #{aspp_forward.1} parent=11 // pred_check
        %p190 = pneg %p140
      $region18: #{aspp_forward.1} parent=11 // pred_check_branch
        %192 = sbr.rel (%p190) target = $region20
      $region19: #{aspp_forward.1} parent=11 // pred_region
        _
      $region20: #{aspp_forward.1} parent=11 // pred_fallthru
        _
    $region12: #{aspp_forward.1} parent=5 // pred_fallthru
      _
    %p193 = scmp.lt.s32.totalorder %s10, 4
    // Predicated region
    $region21: #{aspp_forward.1} parent=5 // pred_check
      %p194 = pneg %p193
    $region22: #{aspp_forward.1} parent=5 // pred_check_branch
      %196 = sbr.rel (%p194) target = $region24
    $region23: #{aspp_forward.1} parent=5 // pred_region
      // Predicated region
      $region25: #{aspp_forward.1} parent=23 // pred_check
        %p197 = pneg %p53
      $region26: #{aspp_forward.1} parent=23 // pred_check_branch
        %199 = sbr.rel (%p197) target = $region28
      $region27: #{aspp_forward.1} parent=23 // pred_region
        %s200 = smul.u32 8, %s18
        %s201 = ssub.s32 20, %s200
        %p202 = scmp.lt.s32.totalorder %s201, 8
        %s203 = scalar_select %p202, %s201, 8
        %s204 = smul.u32 8, %s203
        %s205 = smul.u32 %s204, 3
        %p206 = scmp.lt.s32.totalorder %s17, 1
        %s207 = scalar_select %p206, %s17, 1
        %p208 = scmp.lt.s32.totalorder %s200, 19
        %s209 = scalar_select %p208, %s200, 19
        %p210 = scmp.lt.s32.totalorder %s19, 0
        %s211 = scalar_select %p210, %s19, 0
        %s212 = smul.addr %s209, 3
        %s213 = sadd.s32 %s211, %s212
        %s214 = smul.addr %s207, 60
        %s215 = sadd.s32 %s213, %s214
        %s216 = smul.addr %s215, 8
        %s217 = scalar_lea.vmem %s0, %s216
        %s218 = smul.u32 8, %s18
        %s219 = ssub.s32 20, %s218
        %p220 = scmp.lt.s32.totalorder %s219, 8
        %s221 = scalar_select %p220, %s219, 8
        %s222 = smul.u32 8, %s221
        %s223 = smul.u32 %s222, 3
      $region28: #{aspp_forward.1} parent=23 // pred_fallthru
        _
      // Predicated region
      $region29: #{aspp_forward.1} parent=23 // pred_check
        %p224 = pneg %p87
      $region30: #{aspp_forward.1} parent=23 // pred_check_branch
        %226 = sbr.rel (%p224) target = $region32
      $region31: #{aspp_forward.1} parent=23 // pred_region
        %s227 = sadd.s32 %s18, 1
        %s228 = smul.u32 %s227, 2
        %s229 = smul.u32 4, %s228
        %p230 = scmp.lt.s32.totalorder %s17, 1
        %s231 = scalar_select %p230, %s17, 1
        %p232 = scmp.lt.s32.totalorder %s229, 19
        %s233 = scalar_select %p232, %s229, 19
        %p234 = scmp.lt.s32.totalorder %s19, 0
        %s235 = scalar_select %p234, %s19, 0
        %s236 = smul.addr %s233, 3
        %s237 = sadd.s32 %s235, %s236
        %s238 = smul.addr %s231, 60
        %s239 = sadd.s32 %s237, %s238
        %s240 = smul.addr %s239, 8
        %s241 = scalar_lea.vmem %s1, %s240
        %s242 = sadd.s32 %s18, 1
        %s243 = smul.u32 %s242, 2
        %s244 = smul.u32 4, %s243
      $region32: #{aspp_forward.1} parent=23 // pred_fallthru
        _
    $region24: #{aspp_forward.1} parent=5 // pred_fallthru
      _
    %p245 = scmp.le.s32.totalorder 1, %s10
    %p246 = scmp.lt.s32.totalorder %s10, 5
    %p247 = pnand %p245, %p246
    %p248 = pneg %p247
    // Predicated region
    $region33: #{aspp_forward.1} parent=5 // pred_check
      _
    $region34: #{aspp_forward.1} parent=5 // pred_check_branch
      %250 = sbr.rel (%p247) target = $region36
    $region35: #{aspp_forward.1} parent=5 // pred_region
      %s251 = ssub.s32 %s10, 1
      %s252 = smul.u32 8, %s21
      %s253 = ssub.s32 20, %s252
      %p254 = scmp.lt.s32.totalorder %s253, 8
      %s255 = scalar_select %p254, %s253, 8
      %s256 = smul.u32 8, %s255
      %s257 = smul.u32 %s256, 3
      %p258 = scmp.lt.s32.totalorder %s20, 1
      %s259 = scalar_select %p258, %s20, 1
      %p260 = scmp.lt.s32.totalorder %s252, 19
      %s261 = scalar_select %p260, %s252, 19
      %p262 = scmp.lt.s32.totalorder %s22, 0
      %s263 = scalar_select %p262, %s22, 0
      %s264 = smul.addr %s261, 3
      %s265 = sadd.s32 %s263, %s264
      %s266 = smul.addr %s259, 60
      %s267 = sadd.s32 %s265, %s266
      %s268 = smul.addr %s267, 8
      %s269 = scalar_lea.vmem %s0, %s268
      %p270 = pneg %p59
      %p271 = pneg %p56
      %s272 = sadd.s32 %s21, 1
      %s273 = smul.u32 %s272, 2
      %s274 = smul.u32 4, %s273
      %p275 = scmp.lt.s32.totalorder %s20, 1
      %s276 = scalar_select %p275, %s20, 1
      %p277 = scmp.lt.s32.totalorder %s274, 19
      %s278 = scalar_select %p277, %s274, 19
      %p279 = scmp.lt.s32.totalorder %s22, 0
      %s280 = scalar_select %p279, %s22, 0
      %s281 = smul.addr %s278, 3
      %s282 = sadd.s32 %s280, %s281
      %s283 = smul.addr %s276, 60
      %s284 = sadd.s32 %s282, %s283
      %s285 = smul.addr %s284, 8
      %s286 = scalar_lea.vmem %s1, %s285
      %p287 = pneg %p93
      %p288 = pneg %p90
      %p289 = scmp.lt.s32.totalorder %s22, 0
      %s290 = scalar_select %p289, %s22, 0
      %s291 = smul.addr %s290, 4
      %s292 = scalar_lea.vmem %s2, %s291
      %p293 = pneg %p119
      %p294 = pneg %p116
      %p295 = pneg %p140
      %p296 = pneg %p137
      %p297 = pneg %p168
      %p298 = pneg %p165
      %s299 = smul.u32 8, %s21
      %p300 = scmp.lt.s32.totalorder %s20, 1
      %s301 = scalar_select %p300, %s20, 1
      %p302 = scmp.lt.s32.totalorder %s299, 15
      %s303 = scalar_select %p302, %s299, 15
      %s304 = smul.addr %s303, 2
      %s305 = smul.addr %s301, 32
      %s306 = sadd.s32 %s304, %s305
      %s307 = smul.addr %s306, 8
      %s308 = scalar_lea.vmem %s4, %s307
      %s309 = smul.u32 8, %s21
      %s310 = ssub.s32 20, %s309
      %p311 = scmp.lt.s32.totalorder %s310, 8
      %s312 = scalar_select %p311, %s310, 8
      %s313 = smul.u32 8, %s312
      %s314 = smul.u32 %s313, 3
      %p315 = scmp.lt.s32.totalorder %s20, 1
      %s316 = scalar_select %p315, %s20, 1
      %p317 = scmp.lt.s32.totalorder %s309, 19
      %s318 = scalar_select %p317, %s309, 19
      %p319 = scmp.lt.s32.totalorder %s22, 0
      %s320 = scalar_select %p319, %s22, 0
      %s321 = smul.addr %s318, 3
      %s322 = sadd.s32 %s320, %s321
      %s323 = smul.addr %s316, 60
      %s324 = sadd.s32 %s322, %s323
      %s325 = smul.addr %s324, 8
      %s326 = scalar_lea.vmem %s0, %s325
      %s327 = smul.u32 8, %s21
      %s328 = ssub.s32 20, %s327
      %p329 = scmp.lt.s32.totalorder %s328, 8
      %s330 = scalar_select %p329, %s328, 8
      %s331 = smul.u32 8, %s330
      %s332 = smul.u32 %s331, 3
      %s333 = sadd.s32 %s21, 1
      %s334 = smul.u32 %s333, 2
      %s335 = smul.u32 4, %s334
      %p336 = scmp.lt.s32.totalorder %s20, 1
      %s337 = scalar_select %p336, %s20, 1
      %p338 = scmp.lt.s32.totalorder %s335, 19
      %s339 = scalar_select %p338, %s335, 19
      %p340 = scmp.lt.s32.totalorder %s22, 0
      %s341 = scalar_select %p340, %s22, 0
      %s342 = smul.addr %s339, 3
      %s343 = sadd.s32 %s341, %s342
      %s344 = smul.addr %s337, 60
      %s345 = sadd.s32 %s343, %s344
      %s346 = smul.addr %s345, 8
      %s347 = scalar_lea.vmem %s1, %s346
      %s348 = sadd.s32 %s21, 1
      %s349 = smul.u32 %s348, 2
      %s350 = smul.u32 4, %s349
      %p351 = scmp.lt.s32.totalorder %s22, 0
      %s352 = scalar_select %p351, %s22, 0
      %s353 = smul.addr %s352, 4
      %s354 = scalar_lea.vmem %s2, %s353
      %s355 = smul.u32 8, %s21
      %p356 = scmp.lt.s32.totalorder %s20, 1
      %s357 = scalar_select %p356, %s20, 1
      %p358 = scmp.lt.s32.totalorder %s355, 15
      %s359 = scalar_select %p358, %s355, 15
      %s360 = smul.addr %s359, 2
      %s361 = smul.addr %s357, 32
      %s362 = sadd.s32 %s360, %s361
      %s363 = smul.addr %s362, 8
      %s364 = scalar_lea.vmem %s4, %s363
      %s365 = smul.u32 8, %s21
      %p366 = scmp.eq.s32.totalorder %s22, 0
      // Predicated region
      $region37: #{aspp_forward.1} parent=35 // pred_check
        %p367 = pneg %p366
      $region38: #{aspp_forward.1} parent=35 // pred_check_branch
        %369 = sbr.rel (%p367) target = $region40
      $region39: #{aspp_forward.1} parent=35 // pred_region
        %v370 = vld [vmem:[%s3] sm:$0x1]
        %v372 = vperm.slane %v370, 0
        %374 = vst [vmem:[#allocation2] sm:$0xff] %v372
        %375 = vst [vmem:[#allocation2 + $0x8] sm:$0xff] %v372
        %376 = vst [vmem:[#allocation2 + $0x10] sm:$0xff] %v372
        %377 = vst [vmem:[#allocation2 + $0x18] sm:$0xff] %v372
        %378 = vst [vmem:[#allocation2 + $0x20] sm:$0xff] %v372
        %379 = vst [vmem:[#allocation2 + $0x28] sm:$0xff] %v372
        %380 = vst [vmem:[#allocation2 + $0x30] sm:$0xff] %v372
        %381 = vst [vmem:[#allocation2 + $0x38] sm:$0xff] %v372
        %382 = vst [vmem:[#allocation2 + $0x40] sm:$0xff] %v372
        %383 = vst [vmem:[#allocation2 + $0x48] sm:$0xff] %v372
        %384 = vst [vmem:[#allocation2 + $0x50] sm:$0xff] %v372
        %385 = vst [vmem:[#allocation2 + $0x58] sm:$0xff] %v372
        %386 = vst [vmem:[#allocation2 + $0x60] sm:$0xff] %v372
        %387 = vst [vmem:[#allocation2 + $0x68] sm:$0xff] %v372
        %388 = vst [vmem:[#allocation2 + $0x70] sm:$0xff] %v372
        %389 = vst [vmem:[#allocation2 + $0x78] sm:$0xff] %v372
      $region40: #{aspp_forward.1} parent=35 // pred_fallthru
        _
      %v390 = vld [vmem:[%s354] sm:$0xf]
      %v391 = vld [vmem:[%s326] sm:$0xff]
      %v392 = vld [vmem:[%s326 + $0x8] sm:$0xff]
      %v393 = vld [vmem:[%s326 + $0x18] sm:$0xff]
      %v394 = vld [vmem:[%s326 + $0x20] sm:$0xff]
      %v395 = vld [vmem:[%s326 + $0x30] sm:$0xff]
      %v396 = vld [vmem:[%s326 + $0x38] sm:$0xff]
      %v397 = vld [vmem:[%s326 + $0x48] sm:$0xff]
      %v398 = vld [vmem:[%s326 + $0x50] sm:$0xff]
      %v399 = vld [vmem:[%s326 + $0x60] sm:$0xff]
      %v400 = vld [vmem:[%s326 + $0x68] sm:$0xff]
      %v401 = vld [vmem:[%s326 + $0x78] sm:$0xff]
      %v402 = vld [vmem:[%s326 + $0x80] sm:$0xff]
      %v403 = vld [vmem:[%s326 + $0x90] sm:$0xff]
      %v404 = vld [vmem:[%s326 + $0x98] sm:$0xff]
      %v405 = vld [vmem:[%s326 + $0xa8] sm:$0xff]
      %v406 = vld [vmem:[%s326 + $0xb0] sm:$0xff]
      %v407 = vld [vmem:[#allocation2] sm:$0xff]
      %v408 = vld [vmem:[#allocation2 + $0x8] sm:$0xff]
      %v409 = vld [vmem:[#allocation2 + $0x10] sm:$0xff]
      %v410 = vld [vmem:[#allocation2 + $0x18] sm:$0xff]
      %v411 = vld [vmem:[#allocation2 + $0x20] sm:$0xff]
      %v412 = vld [vmem:[#allocation2 + $0x28] sm:$0xff]
      %v413 = vld [vmem:[#allocation2 + $0x30] sm:$0xff]
      %v414 = vld [vmem:[#allocation2 + $0x38] sm:$0xff]
      %v415 = vld [vmem:[#allocation2 + $0x40] sm:$0xff]
      %v416 = vld [vmem:[#allocation2 + $0x48] sm:$0xff]
      %v417 = vld [vmem:[#allocation2 + $0x50] sm:$0xff]
      %v418 = vld [vmem:[#allocation2 + $0x58] sm:$0xff]
      %v419 = vld [vmem:[#allocation2 + $0x60] sm:$0xff]
      %v420 = vld [vmem:[#allocation2 + $0x68] sm:$0xff]
      %v421 = vld [vmem:[#allocation2 + $0x70] sm:$0xff]
      %v422 = vld [vmem:[#allocation2 + $0x78] sm:$0xff]
      %vm423 = vcmask 31744
      %v425 = vsel %vm423, %v391, 0
      %v428 = vsel %vm423, %v392, 0
      %v431 = vsel %vm423, %v393, 0
      %v434 = vsel %vm423, %v394, 0
      %v437 = vsel %vm423, %v395, 0
      %v440 = vsel %vm423, %v396, 0
      %v443 = vsel %vm423, %v397, 0
      %v446 = vsel %vm423, %v398, 0
      %v449 = vsel %vm423, %v399, 0
      %v452 = vsel %vm423, %v400, 0
      %v455 = vsel %vm423, %v401, 0
      %v458 = vsel %vm423, %v402, 0
      %v461 = vsel %vm423, %v403, 0
      %v464 = vsel %vm423, %v404, 0
      %v467 = vsel %vm423, %v405, 0
      %v470 = vsel %vm423, %v406, 0
      %vm472 = vcmask 1043456
      %v474 = vsel %vm472, %v390, 0
      %476 = vmatpush.msra.mxu0 0.0
      %477 = vmatpush.msra.mxu0 0.0
      %478 = vmatpush.msra.mxu0 0.0
      %479 = vmatpush.msra.mxu0 0.0
      %480 = vmatpush.msra.mxu0 0.0
      %481 = vmatpush.msra.mxu0 0.0
      %482 = vmatpush.msra.mxu0 0.0
      %483 = vmatpush.msra.mxu0 0.0
      %484 = vmatpush.msra.mxu0 0.0
      %485 = vmatpush.msra.mxu0 0.0
      %486 = vmatpush.msra.mxu0 0.0
      %487 = vmatpush.msra.mxu0 0.0
      %488 = vmatpush.msra.mxu0 0.0
      %489 = vmatpush.msra.mxu0 0.0
      %490 = vmatpush.msra.mxu0 0.0
      %491 = vmatpush.msra.mxu0 %v474
      %492 = vmatmul.f32.gmra.mxu0 %v425
      %v493 = vpop.f32.mrf.mxu0
      %v494 = vadd.f32 0.0, %v493
      %495 = vmatmul.f32.gmra.mxu0 %v428
      %v496 = vpop.f32.mrf.mxu0
      %v497 = vadd.f32 0.0, %v496
      %498 = vmatmul.f32.gmra.mxu0 %v431
      %v499 = vpop.f32.mrf.mxu0
      %v500 = vadd.f32 0.0, %v499
      %501 = vmatmul.f32.gmra.mxu0 %v434
      %v502 = vpop.f32.mrf.mxu0
      %v503 = vadd.f32 0.0, %v502
      %504 = vmatmul.f32.gmra.mxu0 %v437
      %v505 = vpop.f32.mrf.mxu0
      %v506 = vadd.f32 0.0, %v505
      %507 = vmatmul.f32.gmra.mxu0 %v440
      %v508 = vpop.f32.mrf.mxu0
      %v509 = vadd.f32 0.0, %v508
      %510 = vmatmul.f32.gmra.mxu0 %v443
      %v511 = vpop.f32.mrf.mxu0
      %v512 = vadd.f32 0.0, %v511
      %513 = vmatmul.f32.gmra.mxu0 %v446
      %v514 = vpop.f32.mrf.mxu0
      %v515 = vadd.f32 0.0, %v514
      %516 = vmatmul.f32.gmra.mxu0 %v449
      %v517 = vpop.f32.mrf.mxu0
      %v518 = vadd.f32 0.0, %v517
      %519 = vmatmul.f32.gmra.mxu0 %v452
      %v520 = vpop.f32.mrf.mxu0
      %v521 = vadd.f32 0.0, %v520
      %522 = vmatmul.f32.gmra.mxu0 %v455
      %v523 = vpop.f32.mrf.mxu0
      %v524 = vadd.f32 0.0, %v523
      %525 = vmatmul.f32.gmra.mxu0 %v458
      %v526 = vpop.f32.mrf.mxu0
      %v527 = vadd.f32 0.0, %v526
      %528 = vmatmul.f32.gmra.mxu0 %v461
      %v529 = vpop.f32.mrf.mxu0
      %v530 = vadd.f32 0.0, %v529
      %531 = vmatmul.f32.gmra.mxu0 %v464
      %v532 = vpop.f32.mrf.mxu0
      %v533 = vadd.f32 0.0, %v532
      %534 = vmatmul.f32.gmra.mxu0 %v467
      %v535 = vpop.f32.mrf.mxu0
      %v536 = vadd.f32 0.0, %v535
      %537 = vmatmul.f32.gmra.mxu0 %v470
      %v538 = vpop.f32.mrf.mxu0
      %v539 = vadd.f32 0.0, %v538
      %540 = vdwg.mxu0
      %v541 = vadd.f32 %v407, %v494
      %v542 = vadd.f32 %v408, %v497
      %v543 = vadd.f32 %v409, %v500
      %v544 = vadd.f32 %v410, %v503
      %v545 = vadd.f32 %v411, %v506
      %v546 = vadd.f32 %v412, %v509
      %v547 = vadd.f32 %v413, %v512
      %v548 = vadd.f32 %v414, %v515
      %v549 = vadd.f32 %v415, %v518
      %v550 = vadd.f32 %v416, %v521
      %v551 = vadd.f32 %v417, %v524
      %v552 = vadd.f32 %v418, %v527
      %v553 = vadd.f32 %v419, %v530
      %v554 = vadd.f32 %v420, %v533
      %v555 = vadd.f32 %v421, %v536
      %v556 = vadd.f32 %v422, %v539
      %557 = vst [vmem:[#allocation2] sm:$0xff] %v541
      %558 = vst [vmem:[#allocation2 + $0x8] sm:$0xff] %v542
      %559 = vst [vmem:[#allocation2 + $0x10] sm:$0xff] %v543
      %560 = vst [vmem:[#allocation2 + $0x18] sm:$0xff] %v544
      %561 = vst [vmem:[#allocation2 + $0x20] sm:$0xff] %v545
      %562 = vst [vmem:[#allocation2 + $0x28] sm:$0xff] %v546
      %563 = vst [vmem:[#allocation2 + $0x30] sm:$0xff] %v547
      %564 = vst [vmem:[#allocation2 + $0x38] sm:$0xff] %v548
      %565 = vst [vmem:[#allocation2 + $0x40] sm:$0xff] %v549
      %566 = vst [vmem:[#allocation2 + $0x48] sm:$0xff] %v550
      %567 = vst [vmem:[#allocation2 + $0x50] sm:$0xff] %v551
      %568 = vst [vmem:[#allocation2 + $0x58] sm:$0xff] %v552
      %569 = vst [vmem:[#allocation2 + $0x60] sm:$0xff] %v553
      %570 = vst [vmem:[#allocation2 + $0x68] sm:$0xff] %v554
      %571 = vst [vmem:[#allocation2 + $0x70] sm:$0xff] %v555
      %572 = vst [vmem:[#allocation2 + $0x78] sm:$0xff] %v556
      %s573 = scalar_lea.vmem %s354, 4
      %v574 = vld [vmem:[%s573] sm:$0xf]
      %v575 = vld [vmem:[%s326 + $0x2] sm:$0xff]
      %v576 = vld [vmem:[%s326 + $0xa] sm:$0xff]
      %v577 = vld [vmem:[%s326 + $0x1a] sm:$0xff]
      %v578 = vld [vmem:[%s326 + $0x22] sm:$0xff]
      %v579 = vld [vmem:[%s326 + $0x32] sm:$0xff]
      %v580 = vld [vmem:[%s326 + $0x3a] sm:$0xff]
      %v581 = vld [vmem:[%s326 + $0x4a] sm:$0xff]
      %v582 = vld [vmem:[%s326 + $0x52] sm:$0xff]
      %v583 = vld [vmem:[%s326 + $0x62] sm:$0xff]
      %v584 = vld [vmem:[%s326 + $0x6a] sm:$0xff]
      %v585 = vld [vmem:[%s326 + $0x7a] sm:$0xff]
      %v586 = vld [vmem:[%s326 + $0x82] sm:$0xff]
      %v587 = vld [vmem:[%s326 + $0x92] sm:$0xff]
      %v588 = vld [vmem:[%s326 + $0x9a] sm:$0xff]
      %v589 = vld [vmem:[%s326 + $0xaa] sm:$0xff]
      %v590 = vld [vmem:[%s326 + $0xb2] sm:$0xff]
      %v591 = vld [vmem:[#allocation2] sm:$0xff]
      %v592 = vld [vmem:[#allocation2 + $0x8] sm:$0xff]
      %v593 = vld [vmem:[#allocation2 + $0x10] sm:$0xff]
      %v594 = vld [vmem:[#allocation2 + $0x18] sm:$0xff]
      %v595 = vld [vmem:[#allocation2 + $0x20] sm:$0xff]
      %v596 = vld [vmem:[#allocation2 + $0x28] sm:$0xff]
      %v597 = vld [vmem:[#allocation2 + $0x30] sm:$0xff]
      %v598 = vld [vmem:[#allocation2 + $0x38] sm:$0xff]
      %v599 = vld [vmem:[#allocation2 + $0x40] sm:$0xff]
      %v600 = vld [vmem:[#allocation2 + $0x48] sm:$0xff]
      %v601 = vld [vmem:[#allocation2 + $0x50] sm:$0xff]
      %v602 = vld [vmem:[#allocation2 + $0x58] sm:$0xff]
      %v603 = vld [vmem:[#allocation2 + $0x60] sm:$0xff]
      %v604 = vld [vmem:[#allocation2 + $0x68] sm:$0xff]
      %v605 = vld [vmem:[#allocation2 + $0x70] sm:$0xff]
      %v606 = vld [vmem:[#allocation2 + $0x78] sm:$0xff]
      %v608 = vsel %vm423, %v575, 0
      %v611 = vsel %vm423, %v576, 0
      %v614 = vsel %vm423, %v577, 0
      %v617 = vsel %vm423, %v578, 0
      %v620 = vsel %vm423, %v579, 0
      %v623 = vsel %vm423, %v580, 0
      %v626 = vsel %vm423, %v581, 0
      %v629 = vsel %vm423, %v582, 0
      %v632 = vsel %vm423, %v583, 0
      %v635 = vsel %vm423, %v584, 0
      %v638 = vsel %vm423, %v585, 0
      %v641 = vsel %vm423, %v586, 0
      %v644 = vsel %vm423, %v587, 0
      %v647 = vsel %vm423, %v588, 0
      %v650 = vsel %vm423, %v589, 0
      %v653 = vsel %vm423, %v590, 0
      %v656 = vsel %vm472, %v574, 0
      %658 = vmatpush.msra.mxu0 0.0
      %659 = vmatpush.msra.mxu0 0.0
      %660 = vmatpush.msra.mxu0 0.0
      %661 = vmatpush.msra.mxu0 0.0
      %662 = vmatpush.msra.mxu0 0.0
      %663 = vmatpush.msra.mxu0 0.0
      %664 = vmatpush.msra.mxu0 0.0
      %665 = vmatpush.msra.mxu0 0.0
      %666 = vmatpush.msra.mxu0 0.0
      %667 = vmatpush.msra.mxu0 0.0
      %668 = vmatpush.msra.mxu0 0.0
      %669 = vmatpush.msra.mxu0 0.0
      %670 = vmatpush.msra.mxu0 0.0
      %671 = vmatpush.msra.mxu0 0.0
      %672 = vmatpush.msra.mxu0 0.0
      %673 = vmatpush.msra.mxu0 %v656
      %674 = vmatmul.f32.gmra.mxu0 %v608
      %v675 = vpop.f32.mrf.mxu0
      %v676 = vadd.f32 0.0, %v675
      %677 = vmatmul.f32.gmra.mxu0 %v611
      %v678 = vpop.f32.mrf.mxu0
      %v679 = vadd.f32 0.0, %v678
      %680 = vmatmul.f32.gmra.mxu0 %v614
      %v681 = vpop.f32.mrf.mxu0
      %v682 = vadd.f32 0.0, %v681
      %683 = vmatmul.f32.gmra.mxu0 %v617
      %v684 = vpop.f32.mrf.mxu0
      %v685 = vadd.f32 0.0, %v684
      %686 = vmatmul.f32.gmra.mxu0 %v620
      %v687 = vpop.f32.mrf.mxu0
      %v688 = vadd.f32 0.0, %v687
      %689 = vmatmul.f32.gmra.mxu0 %v623
      %v690 = vpop.f32.mrf.mxu0
      %v691 = vadd.f32 0.0, %v690
      %692 = vmatmul.f32.gmra.mxu0 %v626
      %v693 = vpop.f32.mrf.mxu0
      %v694 = vadd.f32 0.0, %v693
      %695 = vmatmul.f32.gmra.mxu0 %v629
      %v696 = vpop.f32.mrf.mxu0
      %v697 = vadd.f32 0.0, %v696
      %698 = vmatmul.f32.gmra.mxu0 %v632
      %v699 = vpop.f32.mrf.mxu0
      %v700 = vadd.f32 0.0, %v699
      %701 = vmatmul.f32.gmra.mxu0 %v635
      %v702 = vpop.f32.mrf.mxu0
      %v703 = vadd.f32 0.0, %v702
      %704 = vmatmul.f32.gmra.mxu0 %v638
      %v705 = vpop.f32.mrf.mxu0
      %v706 = vadd.f32 0.0, %v705
      %707 = vmatmul.f32.gmra.mxu0 %v641
      %v708 = vpop.f32.mrf.mxu0
      %v709 = vadd.f32 0.0, %v708
      %710 = vmatmul.f32.gmra.mxu0 %v644
      %v711 = vpop.f32.mrf.mxu0
      %v712 = vadd.f32 0.0, %v711
      %713 = vmatmul.f32.gmra.mxu0 %v647
      %v714 = vpop.f32.mrf.mxu0
      %v715 = vadd.f32 0.0, %v714
      %716 = vmatmul.f32.gmra.mxu0 %v650
      %v717 = vpop.f32.mrf.mxu0
      %v718 = vadd.f32 0.0, %v717
      %719 = vmatmul.f32.gmra.mxu0 %v653
      %v720 = vpop.f32.mrf.mxu0
      %v721 = vadd.f32 0.0, %v720
      %722 = vdwg.mxu0
      %v723 = vadd.f32 %v591, %v676
      %v724 = vadd.f32 %v592, %v679
      %v725 = vadd.f32 %v593, %v682
      %v726 = vadd.f32 %v594, %v685
      %v727 = vadd.f32 %v595, %v688
      %v728 = vadd.f32 %v596, %v691
      %v729 = vadd.f32 %v597, %v694
      %v730 = vadd.f32 %v598, %v697
      %v731 = vadd.f32 %v599, %v700
      %v732 = vadd.f32 %v600, %v703
      %v733 = vadd.f32 %v601, %v706
      %v734 = vadd.f32 %v602, %v709
      %v735 = vadd.f32 %v603, %v712
      %v736 = vadd.f32 %v604, %v715
      %v737 = vadd.f32 %v605, %v718
      %v738 = vadd.f32 %v606, %v721
      %739 = vst [vmem:[#allocation2] sm:$0xff] %v723
      %740 = vst [vmem:[#allocation2 + $0x8] sm:$0xff] %v724
      %741 = vst [vmem:[#allocation2 + $0x10] sm:$0xff] %v725
      %742 = vst [vmem:[#allocation2 + $0x18] sm:$0xff] %v726
      %743 = vst [vmem:[#allocation2 + $0x20] sm:$0xff] %v727
      %744 = vst [vmem:[#allocation2 + $0x28] sm:$0xff] %v728
      %745 = vst [vmem:[#allocation2 + $0x30] sm:$0xff] %v729
      %746 = vst [vmem:[#allocation2 + $0x38] sm:$0xff] %v730
      %747 = vst [vmem:[#allocation2 + $0x40] sm:$0xff] %v731
      %748 = vst [vmem:[#allocation2 + $0x48] sm:$0xff] %v732
      %749 = vst [vmem:[#allocation2 + $0x50] sm:$0xff] %v733
      %750 = vst [vmem:[#allocation2 + $0x58] sm:$0xff] %v734
      %751 = vst [vmem:[#allocation2 + $0x60] sm:$0xff] %v735
      %752 = vst [vmem:[#allocation2 + $0x68] sm:$0xff] %v736
      %753 = vst [vmem:[#allocation2 + $0x70] sm:$0xff] %v737
      %754 = vst [vmem:[#allocation2 + $0x78] sm:$0xff] %v738
      %s755 = scalar_lea.vmem %s354, 8
      %v756 = vld [vmem:[%s755] sm:$0xf]
      %v757 = vld [vmem:[%s326 + $0x4] sm:$0xff]
      %v758 = vld [vmem:[%s326 + $0xc] sm:$0xff]
      %v759 = vld [vmem:[%s326 + $0x1c] sm:$0xff]
      %v760 = vld [vmem:[%s326 + $0x24] sm:$0xff]
      %v761 = vld [vmem:[%s326 + $0x34] sm:$0xff]
      %v762 = vld [vmem:[%s326 + $0x3c] sm:$0xff]
      %v763 = vld [vmem:[%s326 + $0x4c] sm:$0xff]
      %v764 = vld [vmem:[%s326 + $0x54] sm:$0xff]
      %v765 = vld [vmem:[%s326 + $0x64] sm:$0xff]
      %v766 = vld [vmem:[%s326 + $0x6c] sm:$0xff]
      %v767 = vld [vmem:[%s326 + $0x7c] sm:$0xff]
      %v768 = vld [vmem:[%s326 + $0x84] sm:$0xff]
      %v769 = vld [vmem:[%s326 + $0x94] sm:$0xff]
      %v770 = vld [vmem:[%s326 + $0x9c] sm:$0xff]
      %v771 = vld [vmem:[%s326 + $0xac] sm:$0xff]
      %v772 = vld [vmem:[%s326 + $0xb4] sm:$0xff]
      %v773 = vld [vmem:[#allocation2] sm:$0xff]
      %v774 = vld [vmem:[#allocation2 + $0x8] sm:$0xff]
      %v775 = vld [vmem:[#allocation2 + $0x10] sm:$0xff]
      %v776 = vld [vmem:[#allocation2 + $0x18] sm:$0xff]
      %v777 = vld [vmem:[#allocation2 + $0x20] sm:$0xff]
      %v778 = vld [vmem:[#allocation2 + $0x28] sm:$0xff]
      %v779 = vld [vmem:[#allocation2 + $0x30] sm:$0xff]
      %v780 = vld [vmem:[#allocation2 + $0x38] sm:$0xff]
      %v781 = vld [vmem:[#allocation2 + $0x40] sm:$0xff]
      %v782 = vld [vmem:[#allocation2 + $0x48] sm:$0xff]
      %v783 = vld [vmem:[#allocation2 + $0x50] sm:$0xff]
      %v784 = vld [vmem:[#allocation2 + $0x58] sm:$0xff]
      %v785 = vld [vmem:[#allocation2 + $0x60] sm:$0xff]
      %v786 = vld [vmem:[#allocation2 + $0x68] sm:$0xff]
      %v787 = vld [vmem:[#allocation2 + $0x70] sm:$0xff]
      %v788 = vld [vmem:[#allocation2 + $0x78] sm:$0xff]
      %v790 = vsel %vm423, %v757, 0
      %v793 = vsel %vm423, %v758, 0
      %v796 = vsel %vm423, %v759, 0
      %v799 = vsel %vm423, %v760, 0
      %v802 = vsel %vm423, %v761, 0
      %v805 = vsel %vm423, %v762, 0
      %v808 = vsel %vm423, %v763, 0
      %v811 = vsel %vm423, %v764, 0
      %v814 = vsel %vm423, %v765, 0
      %v817 = vsel %vm423, %v766, 0
      %v820 = vsel %vm423, %v767, 0
      %v823 = vsel %vm423, %v768, 0
      %v826 = vsel %vm423, %v769, 0
      %v829 = vsel %vm423, %v770, 0
      %v832 = vsel %vm423, %v771, 0
      %v835 = vsel %vm423, %v772, 0
      %v838 = vsel %vm472, %v756, 0
      %840 = vmatpush.msra.mxu0 0.0
      %841 = vmatpush.msra.mxu0 0.0
      %842 = vmatpush.msra.mxu0 0.0
      %843 = vmatpush.msra.mxu0 0.0
      %844 = vmatpush.msra.mxu0 0.0
      %845 = vmatpush.msra.mxu0 0.0
      %846 = vmatpush.msra.mxu0 0.0
      %847 = vmatpush.msra.mxu0 0.0
      %848 = vmatpush.msra.mxu0 0.0
      %849 = vmatpush.msra.mxu0 0.0
      %850 = vmatpush.msra.mxu0 0.0
      %851 = vmatpush.msra.mxu0 0.0
      %852 = vmatpush.msra.mxu0 0.0
      %853 = vmatpush.msra.mxu0 0.0
      %854 = vmatpush.msra.mxu0 0.0
      %855 = vmatpush.msra.mxu0 %v838
      %856 = vmatmul.f32.gmra.mxu0 %v790
      %v857 = vpop.f32.mrf.mxu0
      %v858 = vadd.f32 0.0, %v857
      %859 = vmatmul.f32.gmra.mxu0 %v793
      %v860 = vpop.f32.mrf.mxu0
      %v861 = vadd.f32 0.0, %v860
      %862 = vmatmul.f32.gmra.mxu0 %v796
      %v863 = vpop.f32.mrf.mxu0
      %v864 = vadd.f32 0.0, %v863
      %865 = vmatmul.f32.gmra.mxu0 %v799
      %v866 = vpop.f32.mrf.mxu0
      %v867 = vadd.f32 0.0, %v866
      %868 = vmatmul.f32.gmra.mxu0 %v802
      %v869 = vpop.f32.mrf.mxu0
      %v870 = vadd.f32 0.0, %v869
      %871 = vmatmul.f32.gmra.mxu0 %v805
      %v872 = vpop.f32.mrf.mxu0
      %v873 = vadd.f32 0.0, %v872
      %874 = vmatmul.f32.gmra.mxu0 %v808
      %v875 = vpop.f32.mrf.mxu0
      %v876 = vadd.f32 0.0, %v875
      %877 = vmatmul.f32.gmra.mxu0 %v811
      %v878 = vpop.f32.mrf.mxu0
      %v879 = vadd.f32 0.0, %v878
      %880 = vmatmul.f32.gmra.mxu0 %v814
      %v881 = vpop.f32.mrf.mxu0
      %v882 = vadd.f32 0.0, %v881
      %883 = vmatmul.f32.gmra.mxu0 %v817
      %v884 = vpop.f32.mrf.mxu0
      %v885 = vadd.f32 0.0, %v884
      %886 = vmatmul.f32.gmra.mxu0 %v820
      %v887 = vpop.f32.mrf.mxu0
      %v888 = vadd.f32 0.0, %v887
      %889 = vmatmul.f32.gmra.mxu0 %v823
      %v890 = vpop.f32.mrf.mxu0
      %v891 = vadd.f32 0.0, %v890
      %892 = vmatmul.f32.gmra.mxu0 %v826
      %v893 = vpop.f32.mrf.mxu0
      %v894 = vadd.f32 0.0, %v893
      %895 = vmatmul.f32.gmra.mxu0 %v829
      %v896 = vpop.f32.mrf.mxu0
      %v897 = vadd.f32 0.0, %v896
      %898 = vmatmul.f32.gmra.mxu0 %v832
      %v899 = vpop.f32.mrf.mxu0
      %v900 = vadd.f32 0.0, %v899
      %901 = vmatmul.f32.gmra.mxu0 %v835
      %v902 = vpop.f32.mrf.mxu0
      %v903 = vadd.f32 0.0, %v902
      %904 = vdwg.mxu0
      %v905 = vadd.f32 %v773, %v858
      %v906 = vadd.f32 %v774, %v861
      %v907 = vadd.f32 %v775, %v864
      %v908 = vadd.f32 %v776, %v867
      %v909 = vadd.f32 %v777, %v870
      %v910 = vadd.f32 %v778, %v873
      %v911 = vadd.f32 %v779, %v876
      %v912 = vadd.f32 %v780, %v879
      %v913 = vadd.f32 %v781, %v882
      %v914 = vadd.f32 %v782, %v885
      %v915 = vadd.f32 %v783, %v888
      %v916 = vadd.f32 %v784, %v891
      %v917 = vadd.f32 %v785, %v894
      %v918 = vadd.f32 %v786, %v897
      %v919 = vadd.f32 %v787, %v900
      %v920 = vadd.f32 %v788, %v903
      %921 = vst [vmem:[#allocation2] sm:$0xff] %v905
      %922 = vst [vmem:[#allocation2 + $0x8] sm:$0xff] %v906
      %923 = vst [vmem:[#allocation2 + $0x10] sm:$0xff] %v907
      %924 = vst [vmem:[#allocation2 + $0x18] sm:$0xff] %v908
      %925 = vst [vmem:[#allocation2 + $0x20] sm:$0xff] %v909
      %926 = vst [vmem:[#allocation2 + $0x28] sm:$0xff] %v910
      %927 = vst [vmem:[#allocation2 + $0x30] sm:$0xff] %v911
      %928 = vst [vmem:[#allocation2 + $0x38] sm:$0xff] %v912
      %929 = vst [vmem:[#allocation2 + $0x40] sm:$0xff] %v913
      %930 = vst [vmem:[#allocation2 + $0x48] sm:$0xff] %v914
      %931 = vst [vmem:[#allocation2 + $0x50] sm:$0xff] %v915
      %932 = vst [vmem:[#allocation2 + $0x58] sm:$0xff] %v916
      %933 = vst [vmem:[#allocation2 + $0x60] sm:$0xff] %v917
      %934 = vst [vmem:[#allocation2 + $0x68] sm:$0xff] %v918
      %935 = vst [vmem:[#allocation2 + $0x70] sm:$0xff] %v919
      %936 = vst [vmem:[#allocation2 + $0x78] sm:$0xff] %v920
      %s937 = scalar_lea.vmem %s354, 12
      %v938 = vld [vmem:[%s937] sm:$0xf]
      %s939 = scalar_lea.vmem %s326, 48
      %v940 = vld [vmem:[%s939] sm:$0xff]
      %v941 = vld [vmem:[%s939 + $0x8] sm:$0xff]
      %v942 = vld [vmem:[%s939 + $0x18] sm:$0xff]
      %v943 = vld [vmem:[%s939 + $0x20] sm:$0xff]
      %v944 = vld [vmem:[%s939 + $0x30] sm:$0xff]
      %v945 = vld [vmem:[%s939 + $0x38] sm:$0xff]
      %v946 = vld [vmem:[%s939 + $0x48] sm:$0xff]
      %v947 = vld [vmem:[%s939 + $0x50] sm:$0xff]
      %v948 = vld [vmem:[%s939 + $0x60] sm:$0xff]
      %v949 = vld [vmem:[%s939 + $0x68] sm:$0xff]
      %v950 = vld [vmem:[%s939 + $0x78] sm:$0xff]
      %v951 = vld [vmem:[%s939 + $0x80] sm:$0xff]
      %v952 = vld [vmem:[#allocation2] sm:$0xff]
      %v953 = vld [vmem:[#allocation2 + $0x8] sm:$0xff]
      %v954 = vld [vmem:[#allocation2 + $0x10] sm:$0xff]
      %v955 = vld [vmem:[#allocation2 + $0x18] sm:$0xff]
      %v956 = vld [vmem:[#allocation2 + $0x20] sm:$0xff]
      %v957 = vld [vmem:[#allocation2 + $0x28] sm:$0xff]
      %v958 = vld [vmem:[#allocation2 + $0x30] sm:$0xff]
      %v959 = vld [vmem:[#allocation2 + $0x38] sm:$0xff]
      %v960 = vld [vmem:[#allocation2 + $0x40] sm:$0xff]
      %v961 = vld [vmem:[#allocation2 + $0x48] sm:$0xff]
      %v962 = vld [vmem:[#allocation2 + $0x50] sm:$0xff]
      %v963 = vld [vmem:[#allocation2 + $0x58] sm:$0xff]
      %v965 = vsel %vm423, %v940, 0
      %v968 = vsel %vm423, %v941, 0
      %v971 = vsel %vm423, %v942, 0
      %v974 = vsel %vm423, %v943, 0
      %v977 = vsel %vm423, %v944, 0
      %v980 = vsel %vm423, %v945, 0
      %v983 = vsel %vm423, %v946, 0
      %v986 = vsel %vm423, %v947, 0
      %v989 = vsel %vm423, %v948, 0
      %v992 = vsel %vm423, %v949, 0
      %v995 = vsel %vm423, %v950, 0
      %v998 = vsel %vm423, %v951, 0
      %v1001 = vsel %vm472, %v938, 0
      %1003 = vmatpush.msra.mxu0 0.0
      %1004 = vmatpush.msra.mxu0 0.0
      %1005 = vmatpush.msra.mxu0 0.0
      %1006 = vmatpush.msra.mxu0 0.0
      %1007 = vmatpush.msra.mxu0 0.0
      %1008 = vmatpush.msra.mxu0 0.0
      %1009 = vmatpush.msra.mxu0 0.0
      %1010 = vmatpush.msra.mxu0 0.0
      %1011 = vmatpush.msra.mxu0 0.0
      %1012 = vmatpush.msra.mxu0 0.0
      %1013 = vmatpush.msra.mxu0 0.0
      %1014 = vmatpush.msra.mxu0 0.0
      %1015 = vmatpush.msra.mxu0 0.0
      %1016 = vmatpush.msra.mxu0 0.0
      %1017 = vmatpush.msra.mxu0 0.0
      %1018 = vmatpush.msra.mxu0 %v1001
      %1019 = vmatmul.f32.gmra.mxu0 %v965
      %v1020 = vpop.f32.mrf.mxu0
      %v1021 = vadd.f32 0.0, %v1020
      %1022 = vmatmul.f32.gmra.mxu0 %v968
      %v1023 = vpop.f32.mrf.mxu0
      %v1024 = vadd.f32 0.0, %v1023
      %1025 = vmatmul.f32.gmra.mxu0 %v971
      %v1026 = vpop.f32.mrf.mxu0
      %v1027 = vadd.f32 0.0, %v1026
      %1028 = vmatmul.f32.gmra.mxu0 %v974
      %v1029 = vpop.f32.mrf.mxu0
      %v1030 = vadd.f32 0.0, %v1029
      %1031 = vmatmul.f32.gmra.mxu0 %v977
      %v1032 = vpop.f32.mrf.mxu0
      %v1033 = vadd.f32 0.0, %v1032
      %1034 = vmatmul.f32.gmra.mxu0 %v980
      %v1035 = vpop.f32.mrf.mxu0
      %v1036 = vadd.f32 0.0, %v1035
      %1037 = vmatmul.f32.gmra.mxu0 %v983
      %v1038 = vpop.f32.mrf.mxu0
      %v1039 = vadd.f32 0.0, %v1038
      %1040 = vmatmul.f32.gmra.mxu0 %v986
      %v1041 = vpop.f32.mrf.mxu0
      %v1042 = vadd.f32 0.0, %v1041
      %1043 = vmatmul.f32.gmra.mxu0 %v989
      %v1044 = vpop.f32.mrf.mxu0
      %v1045 = vadd.f32 0.0, %v1044
      %1046 = vmatmul.f32.gmra.mxu0 %v992
      %v1047 = vpop.f32.mrf.mxu0
      %v1048 = vadd.f32 0.0, %v1047
      %1049 = vmatmul.f32.gmra.mxu0 %v995
      %v1050 = vpop.f32.mrf.mxu0
      %v1051 = vadd.f32 0.0, %v1050
      %1052 = vmatmul.f32.gmra.mxu0 %v998
      %v1053 = vpop.f32.mrf.mxu0
      %v1054 = vadd.f32 0.0, %v1053
      %1055 = vdwg.mxu0
      %v1056 = vadd.f32 %v952, %v1021
      %v1057 = vadd.f32 %v953, %v1024
      %v1058 = vadd.f32 %v954, %v1027
      %v1059 = vadd.f32 %v955, %v1030
      %v1060 = vadd.f32 %v956, %v1033
      %v1061 = vadd.f32 %v957, %v1036
      %v1062 = vadd.f32 %v958, %v1039
      %v1063 = vadd.f32 %v959, %v1042
      %v1064 = vadd.f32 %v960, %v1045
      %v1065 = vadd.f32 %v961, %v1048
      %v1066 = vadd.f32 %v962, %v1051
      %v1067 = vadd.f32 %v963, %v1054
      %1068 = vst [vmem:[#allocation2] sm:$0xff] %v1056
      %1069 = vst [vmem:[#allocation2 + $0x8] sm:$0xff] %v1057
      %1070 = vst [vmem:[#allocation2 + $0x10] sm:$0xff] %v1058
      %1071 = vst [vmem:[#allocation2 + $0x18] sm:$0xff] %v1059
      %1072 = vst [vmem:[#allocation2 + $0x20] sm:$0xff] %v1060
      %1073 = vst [vmem:[#allocation2 + $0x28] sm:$0xff] %v1061
      %1074 = vst [vmem:[#allocation2 + $0x30] sm:$0xff] %v1062
      %1075 = vst [vmem:[#allocation2 + $0x38] sm:$0xff] %v1063
      %1076 = vst [vmem:[#allocation2 + $0x40] sm:$0xff] %v1064
      %1077 = vst [vmem:[#allocation2 + $0x48] sm:$0xff] %v1065
      %1078 = vst [vmem:[#allocation2 + $0x50] sm:$0xff] %v1066
      %1079 = vst [vmem:[#allocation2 + $0x58] sm:$0xff] %v1067
      %v1080 = vld [vmem:[%s347] sm:$0xff]
      %v1081 = vld [vmem:[%s347 + $0x8] sm:$0xff]
      %v1082 = vld [vmem:[%s347 + $0x18] sm:$0xff]
      %v1083 = vld [vmem:[%s347 + $0x20] sm:$0xff]
      %v1084 = vld [vmem:[#allocation2 + $0x60] sm:$0xff]
      %v1085 = vld [vmem:[#allocation2 + $0x68] sm:$0xff]
      %v1086 = vld [vmem:[#allocation2 + $0x70] sm:$0xff]
      %v1087 = vld [vmem:[#allocation2 + $0x78] sm:$0xff]
      %v1089 = vsel %vm423, %v1080, 0
      %v1092 = vsel %vm423, %v1081, 0
      %v1095 = vsel %vm423, %v1082, 0
      %v1098 = vsel %vm423, %v1083, 0
      %1100 = vmatpush.msra.mxu0 0.0
      %1101 = vmatpush.msra.mxu0 0.0
      %1102 = vmatpush.msra.mxu0 0.0
      %1103 = vmatpush.msra.mxu0 0.0
      %1104 = vmatpush.msra.mxu0 0.0
      %1105 = vmatpush.msra.mxu0 0.0
      %1106 = vmatpush.msra.mxu0 0.0
      %1107 = vmatpush.msra.mxu0 0.0
      %1108 = vmatpush.msra.mxu0 0.0
      %1109 = vmatpush.msra.mxu0 0.0
      %1110 = vmatpush.msra.mxu0 0.0
      %1111 = vmatpush.msra.mxu0 0.0
      %1112 = vmatpush.msra.mxu0 0.0
      %1113 = vmatpush.msra.mxu0 0.0
      %1114 = vmatpush.msra.mxu0 0.0
      %1115 = vmatpush.msra.mxu0 %v1001
      %1116 = vmatmul.f32.gmra.mxu0 %v1089
      %v1117 = vpop.f32.mrf.mxu0
      %v1118 = vadd.f32 0.0, %v1117
      %1119 = vmatmul.f32.gmra.mxu0 %v1092
      %v1120 = vpop.f32.mrf.mxu0
      %v1121 = vadd.f32 0.0, %v1120
      %1122 = vmatmul.f32.gmra.mxu0 %v1095
      %v1123 = vpop.f32.mrf.mxu0
      %v1124 = vadd.f32 0.0, %v1123
      %1125 = vmatmul.f32.gmra.mxu0 %v1098
      %v1126 = vpop.f32.mrf.mxu0
      %v1127 = vadd.f32 0.0, %v1126
      %1128 = vdwg.mxu0
      %v1129 = vadd.f32 %v1084, %v1118
      %v1130 = vadd.f32 %v1085, %v1121
      %v1131 = vadd.f32 %v1086, %v1124
      %v1132 = vadd.f32 %v1087, %v1127
      %1133 = vst [vmem:[#allocation2 + $0x60] sm:$0xff] %v1129
      %1134 = vst [vmem:[#allocation2 + $0x68] sm:$0xff] %v1130
      %1135 = vst [vmem:[#allocation2 + $0x70] sm:$0xff] %v1131
      %1136 = vst [vmem:[#allocation2 + $0x78] sm:$0xff] %v1132
      %s1137 = scalar_lea.vmem %s354, 16
      %v1138 = vld [vmem:[%s1137] sm:$0xf]
      %v1139 = vld [vmem:[%s939 + $0x2] sm:$0xff]
      %v1140 = vld [vmem:[%s939 + $0xa] sm:$0xff]
      %v1141 = vld [vmem:[%s939 + $0x1a] sm:$0xff]
      %v1142 = vld [vmem:[%s939 + $0x22] sm:$0xff]
      %v1143 = vld [vmem:[%s939 + $0x32] sm:$0xff]
      %v1144 = vld [vmem:[%s939 + $0x3a] sm:$0xff]
      %v1145 = vld [vmem:[%s939 + $0x4a] sm:$0xff]
      %v1146 = vld [vmem:[%s939 + $0x52] sm:$0xff]
      %v1147 = vld [vmem:[%s939 + $0x62] sm:$0xff]
      %v1148 = vld [vmem:[%s939 + $0x6a] sm:$0xff]
      %v1149 = vld [vmem:[%s939 + $0x7a] sm:$0xff]
      %v1150 = vld [vmem:[%s939 + $0x82] sm:$0xff]
      %v1151 = vld [vmem:[#allocation2] sm:$0xff]
      %v1152 = vld [vmem:[#allocation2 + $0x8] sm:$0xff]
      %v1153 = vld [vmem:[#allocation2 + $0x10] sm:$0xff]
      %v1154 = vld [vmem:[#allocation2 + $0x18] sm:$0xff]
      %v1155 = vld [vmem:[#allocation2 + $0x20] sm:$0xff]
      %v1156 = vld [vmem:[#allocation2 + $0x28] sm:$0xff]
      %v1157 = vld [vmem:[#allocation2 + $0x30] sm:$0xff]
      %v1158 = vld [vmem:[#allocation2 + $0x38] sm:$0xff]
      %v1159 = vld [vmem:[#allocation2 + $0x40] sm:$0xff]
      %v1160 = vld [vmem:[#allocation2 + $0x48] sm:$0xff]
      %v1161 = vld [vmem:[#allocation2 + $0x50] sm:$0xff]
      %v1162 = vld [vmem:[#allocation2 + $0x58] sm:$0xff]
      %v1164 = vsel %vm423, %v1139, 0
      %v1167 = vsel %vm423, %v1140, 0
      %v1170 = vsel %vm423, %v1141, 0
      %v1173 = vsel %vm423, %v1142, 0
      %v1176 = vsel %vm423, %v1143, 0
      %v1179 = vsel %vm423, %v1144, 0
      %v1182 = vsel %vm423, %v1145, 0
      %v1185 = vsel %vm423, %v1146, 0
      %v1188 = vsel %vm423, %v1147, 0
      %v1191 = vsel %vm423, %v1148, 0
      %v1194 = vsel %vm423, %v1149, 0
      %v1197 = vsel %vm423, %v1150, 0
      %v1200 = vsel %vm472, %v1138, 0
      %1202 = vmatpush.msra.mxu0 0.0
      %1203 = vmatpush.msra.mxu0 0.0
      %1204 = vmatpush.msra.mxu0 0.0
      %1205 = vmatpush.msra.mxu0 0.0
      %1206 = vmatpush.msra.mxu0 0.0
      %1207 = vmatpush.msra.mxu0 0.0
      %1208 = vmatpush.msra.mxu0 0.0
      %1209 = vmatpush.msra.mxu0 0.0
      %1210 = vmatpush.msra.mxu0 0.0
      %1211 = vmatpush.msra.mxu0 0.0
      %1212 = vmatpush.msra.mxu0 0.0
      %1213 = vmatpush.msra.mxu0 0.0
      %1214 = vmatpush.msra.mxu0 0.0
      %1215 = vmatpush.msra.mxu0 0.0
      %1216 = vmatpush.msra.mxu0 0.0
      %1217 = vmatpush.msra.mxu0 %v1200
      %1218 = vmatmul.f32.gmra.mxu0 %v1164
      %v1219 = vpop.f32.mrf.mxu0
      %v1220 = vadd.f32 0.0, %v1219
      %1221 = vmatmul.f32.gmra.mxu0 %v1167
      %v1222 = vpop.f32.mrf.mxu0
      %v1223 = vadd.f32 0.0, %v1222
      %1224 = vmatmul.f32.gmra.mxu0 %v1170
      %v1225 = vpop.f32.mrf.mxu0
      %v1226 = vadd.f32 0.0, %v1225
      %1227 = vmatmul.f32.gmra.mxu0 %v1173
      %v1228 = vpop.f32.mrf.mxu0
      %v1229 = vadd.f32 0.0, %v1228
      %1230 = vmatmul.f32.gmra.mxu0 %v1176
      %v1231 = vpop.f32.mrf.mxu0
      %v1232 = vadd.f32 0.0, %v1231
      %1233 = vmatmul.f32.gmra.mxu0 %v1179
      %v1234 = vpop.f32.mrf.mxu0
      %v1235 = vadd.f32 0.0, %v1234
      %1236 = vmatmul.f32.gmra.mxu0 %v1182
      %v1237 = vpop.f32.mrf.mxu0
      %v1238 = vadd.f32 0.0, %v1237
      %1239 = vmatmul.f32.gmra.mxu0 %v1185
      %v1240 = vpop.f32.mrf.mxu0
      %v1241 = vadd.f32 0.0, %v1240
      %1242 = vmatmul.f32.gmra.mxu0 %v1188
      %v1243 = vpop.f32.mrf.mxu0
      %v1244 = vadd.f32 0.0, %v1243
      %1245 = vmatmul.f32.gmra.mxu0 %v1191
      %v1246 = vpop.f32.mrf.mxu0
      %v1247 = vadd.f32 0.0, %v1246
      %1248 = vmatmul.f32.gmra.mxu0 %v1194
      %v1249 = vpop.f32.mrf.mxu0
      %v1250 = vadd.f32 0.0, %v1249
      %1251 = vmatmul.f32.gmra.mxu0 %v1197
      %v1252 = vpop.f32.mrf.mxu0
      %v1253 = vadd.f32 0.0, %v1252
      %1254 = vdwg.mxu0
      %v1255 = vadd.f32 %v1151, %v1220
      %v1256 = vadd.f32 %v1152, %v1223
      %v1257 = vadd.f32 %v1153, %v1226
      %v1258 = vadd.f32 %v1154, %v1229
      %v1259 = vadd.f32 %v1155, %v1232
      %v1260 = vadd.f32 %v1156, %v1235
      %v1261 = vadd.f32 %v1157, %v1238
      %v1262 = vadd.f32 %v1158, %v1241
      %v1263 = vadd.f32 %v1159, %v1244
      %v1264 = vadd.f32 %v1160, %v1247
      %v1265 = vadd.f32 %v1161, %v1250
      %v1266 = vadd.f32 %v1162, %v1253
      %1267 = vst [vmem:[#allocation2] sm:$0xff] %v1255
      %1268 = vst [vmem:[#allocation2 + $0x8] sm:$0xff] %v1256
      %1269 = vst [vmem:[#allocation2 + $0x10] sm:$0xff] %v1257
      %1270 = vst [vmem:[#allocation2 + $0x18] sm:$0xff] %v1258
      %1271 = vst [vmem:[#allocation2 + $0x20] sm:$0xff] %v1259
      %1272 = vst [vmem:[#allocation2 + $0x28] sm:$0xff] %v1260
      %1273 = vst [vmem:[#allocation2 + $0x30] sm:$0xff] %v1261
      %1274 = vst [vmem:[#allocation2 + $0x38] sm:$0xff] %v1262
      %1275 = vst [vmem:[#allocation2 + $0x40] sm:$0xff] %v1263
      %1276 = vst [vmem:[#allocation2 + $0x48] sm:$0xff] %v1264
      %1277 = vst [vmem:[#allocation2 + $0x50] sm:$0xff] %v1265
      %1278 = vst [vmem:[#allocation2 + $0x58] sm:$0xff] %v1266
      %v1279 = vld [vmem:[%s347 + $0x2] sm:$0xff]
      %v1280 = vld [vmem:[%s347 + $0xa] sm:$0xff]
      %v1281 = vld [vmem:[%s347 + $0x1a] sm:$0xff]
      %v1282 = vld [vmem:[%s347 + $0x22] sm:$0xff]
      %v1283 = vld [vmem:[#allocation2 + $0x60] sm:$0xff]
      %v1284 = vld [vmem:[#allocation2 + $0x68] sm:$0xff]
      %v1285 = vld [vmem:[#allocation2 + $0x70] sm:$0xff]
      %v1286 = vld [vmem:[#allocation2 + $0x78] sm:$0xff]
      %v1288 = vsel %vm423, %v1279, 0
      %v1291 = vsel %vm423, %v1280, 0
      %v1294 = vsel %vm423, %v1281, 0
      %v1297 = vsel %vm423, %v1282, 0
      %1299 = vmatpush.msra.mxu0 0.0
      %1300 = vmatpush.msra.mxu0 0.0
      %1301 = vmatpush.msra.mxu0 0.0
      %1302 = vmatpush.msra.mxu0 0.0
      %1303 = vmatpush.msra.mxu0 0.0
      %1304 = vmatpush.msra.mxu0 0.0
      %1305 = vmatpush.msra.mxu0 0.0
      %1306 = vmatpush.msra.mxu0 0.0
      %1307 = vmatpush.msra.mxu0 0.0
      %1308 = vmatpush.msra.mxu0 0.0
      %1309 = vmatpush.msra.mxu0 0.0
      %1310 = vmatpush.msra.mxu0 0.0
      %1311 = vmatpush.msra.mxu0 0.0
      %1312 = vmatpush.msra.mxu0 0.0
      %1313 = vmatpush.msra.mxu0 0.0
      %1314 = vmatpush.msra.mxu0 %v1200
      %1315 = vmatmul.f32.gmra.mxu0 %v1288
      %v1316 = vpop.f32.mrf.mxu0
      %v1317 = vadd.f32 0.0, %v1316
      %1318 = vmatmul.f32.gmra.mxu0 %v1291
      %v1319 = vpop.f32.mrf.mxu0
      %v1320 = vadd.f32 0.0, %v1319
      %1321 = vmatmul.f32.gmra.mxu0 %v1294
      %v1322 = vpop.f32.mrf.mxu0
      %v1323 = vadd.f32 0.0, %v1322
      %1324 = vmatmul.f32.gmra.mxu0 %v1297
      %v1325 = vpop.f32.mrf.mxu0
      %v1326 = vadd.f32 0.0, %v1325
      %1327 = vdwg.mxu0
      %v1328 = vadd.f32 %v1283, %v1317
      %v1329 = vadd.f32 %v1284, %v1320
      %v1330 = vadd.f32 %v1285, %v1323
      %v1331 = vadd.f32 %v1286, %v1326
      %1332 = vst [vmem:[#allocation2 + $0x60] sm:$0xff] %v1328
      %1333 = vst [vmem:[#allocation2 + $0x68] sm:$0xff] %v1329
      %1334 = vst [vmem:[#allocation2 + $0x70] sm:$0xff] %v1330
      %1335 = vst [vmem:[#allocation2 + $0x78] sm:$0xff] %v1331
      %s1336 = scalar_lea.vmem %s354, 20
      %v1337 = vld [vmem:[%s1336] sm:$0xf]
      %v1338 = vld [vmem:[%s939 + $0x4] sm:$0xff]
      %v1339 = vld [vmem:[%s939 + $0xc] sm:$0xff]
      %v1340 = vld [vmem:[%s939 + $0x1c] sm:$0xff]
      %v1341 = vld [vmem:[%s939 + $0x24] sm:$0xff]
      %v1342 = vld [vmem:[%s939 + $0x34] sm:$0xff]
      %v1343 = vld [vmem:[%s939 + $0x3c] sm:$0xff]
      %v1344 = vld [vmem:[%s939 + $0x4c] sm:$0xff]
      %v1345 = vld [vmem:[%s939 + $0x54] sm:$0xff]
      %v1346 = vld [vmem:[%s939 + $0x64] sm:$0xff]
      %v1347 = vld [vmem:[%s939 + $0x6c] sm:$0xff]
      %v1348 = vld [vmem:[%s939 + $0x7c] sm:$0xff]
      %v1349 = vld [vmem:[%s939 + $0x84] sm:$0xff]
      %v1350 = vld [vmem:[#allocation2] sm:$0xff]
      %v1351 = vld [vmem:[#allocation2 + $0x8] sm:$0xff]
      %v1352 = vld [vmem:[#allocation2 + $0x10] sm:$0xff]
      %v1353 = vld [vmem:[#allocation2 + $0x18] sm:$0xff]
      %v1354 = vld [vmem:[#allocation2 + $0x20] sm:$0xff]
      %v1355 = vld [vmem:[#allocation2 + $0x28] sm:$0xff]
      %v1356 = vld [vmem:[#allocation2 + $0x30] sm:$0xff]
      %v1357 = vld [vmem:[#allocation2 + $0x38] sm:$0xff]
      %v1358 = vld [vmem:[#allocation2 + $0x40] sm:$0xff]
      %v1359 = vld [vmem:[#allocation2 + $0x48] sm:$0xff]
      %v1360 = vld [vmem:[#allocation2 + $0x50] sm:$0xff]
      %v1361 = vld [vmem:[#allocation2 + $0x58] sm:$0xff]
      %v1363 = vsel %vm423, %v1338, 0
      %v1366 = vsel %vm423, %v1339, 0
      %v1369 = vsel %vm423, %v1340, 0
      %v1372 = vsel %vm423, %v1341, 0
      %v1375 = vsel %vm423, %v1342, 0
      %v1378 = vsel %vm423, %v1343, 0
      %v1381 = vsel %vm423, %v1344, 0
      %v1384 = vsel %vm423, %v1345, 0
      %v1387 = vsel %vm423, %v1346, 0
      %v1390 = vsel %vm423, %v1347, 0
      %v1393 = vsel %vm423, %v1348, 0
      %v1396 = vsel %vm423, %v1349, 0
      %v1399 = vsel %vm472, %v1337, 0
      %1401 = vmatpush.msra.mxu0 0.0
      %1402 = vmatpush.msra.mxu0 0.0
      %1403 = vmatpush.msra.mxu0 0.0
      %1404 = vmatpush.msra.mxu0 0.0
      %1405 = vmatpush.msra.mxu0 0.0
      %1406 = vmatpush.msra.mxu0 0.0
      %1407 = vmatpush.msra.mxu0 0.0
      %1408 = vmatpush.msra.mxu0 0.0
      %1409 = vmatpush.msra.mxu0 0.0
      %1410 = vmatpush.msra.mxu0 0.0
      %1411 = vmatpush.msra.mxu0 0.0
      %1412 = vmatpush.msra.mxu0 0.0
      %1413 = vmatpush.msra.mxu0 0.0
      %1414 = vmatpush.msra.mxu0 0.0
      %1415 = vmatpush.msra.mxu0 0.0
      %1416 = vmatpush.msra.mxu0 %v1399
      %1417 = vmatmul.f32.gmra.mxu0 %v1363
      %v1418 = vpop.f32.mrf.mxu0
      %v1419 = vadd.f32 0.0, %v1418
      %1420 = vmatmul.f32.gmra.mxu0 %v1366
      %v1421 = vpop.f32.mrf.mxu0
      %v1422 = vadd.f32 0.0, %v1421
      %1423 = vmatmul.f32.gmra.mxu0 %v1369
      %v1424 = vpop.f32.mrf.mxu0
      %v1425 = vadd.f32 0.0, %v1424
      %1426 = vmatmul.f32.gmra.mxu0 %v1372
      %v1427 = vpop.f32.mrf.mxu0
      %v1428 = vadd.f32 0.0, %v1427
      %1429 = vmatmul.f32.gmra.mxu0 %v1375
      %v1430 = vpop.f32.mrf.mxu0
      %v1431 = vadd.f32 0.0, %v1430
      %1432 = vmatmul.f32.gmra.mxu0 %v1378
      %v1433 = vpop.f32.mrf.mxu0
      %v1434 = vadd.f32 0.0, %v1433
      %1435 = vmatmul.f32.gmra.mxu0 %v1381
      %v1436 = vpop.f32.mrf.mxu0
      %v1437 = vadd.f32 0.0, %v1436
      %1438 = vmatmul.f32.gmra.mxu0 %v1384
      %v1439 = vpop.f32.mrf.mxu0
      %v1440 = vadd.f32 0.0, %v1439
      %1441 = vmatmul.f32.gmra.mxu0 %v1387
      %v1442 = vpop.f32.mrf.mxu0
      %v1443 = vadd.f32 0.0, %v1442
      %1444 = vmatmul.f32.gmra.mxu0 %v1390
      %v1445 = vpop.f32.mrf.mxu0
      %v1446 = vadd.f32 0.0, %v1445
      %1447 = vmatmul.f32.gmra.mxu0 %v1393
      %v1448 = vpop.f32.mrf.mxu0
      %v1449 = vadd.f32 0.0, %v1448
      %1450 = vmatmul.f32.gmra.mxu0 %v1396
      %v1451 = vpop.f32.mrf.mxu0
      %v1452 = vadd.f32 0.0, %v1451
      %1453 = vdwg.mxu0
      %v1454 = vadd.f32 %v1350, %v1419
      %v1455 = vadd.f32 %v1351, %v1422
      %v1456 = vadd.f32 %v1352, %v1425
      %v1457 = vadd.f32 %v1353, %v1428
      %v1458 = vadd.f32 %v1354, %v1431
      %v1459 = vadd.f32 %v1355, %v1434
      %v1460 = vadd.f32 %v1356, %v1437
      %v1461 = vadd.f32 %v1357, %v1440
      %v1462 = vadd.f32 %v1358, %v1443
      %v1463 = vadd.f32 %v1359, %v1446
      %v1464 = vadd.f32 %v1360, %v1449
      %v1465 = vadd.f32 %v1361, %v1452
      %1466 = vst [vmem:[#allocation2] sm:$0xff] %v1454
      %1467 = vst [vmem:[#allocation2 + $0x8] sm:$0xff] %v1455
      %1468 = vst [vmem:[#allocation2 + $0x10] sm:$0xff] %v1456
      %1469 = vst [vmem:[#allocation2 + $0x18] sm:$0xff] %v1457
      %1470 = vst [vmem:[#allocation2 + $0x20] sm:$0xff] %v1458
      %1471 = vst [vmem:[#allocation2 + $0x28] sm:$0xff] %v1459
      %1472 = vst [vmem:[#allocation2 + $0x30] sm:$0xff] %v1460
      %1473 = vst [vmem:[#allocation2 + $0x38] sm:$0xff] %v1461
      %1474 = vst [vmem:[#allocation2 + $0x40] sm:$0xff] %v1462
      %1475 = vst [vmem:[#allocation2 + $0x48] sm:$0xff] %v1463
      %1476 = vst [vmem:[#allocation2 + $0x50] sm:$0xff] %v1464
      %1477 = vst [vmem:[#allocation2 + $0x58] sm:$0xff] %v1465
      %v1478 = vld [vmem:[%s347 + $0x4] sm:$0xff]
      %v1479 = vld [vmem:[%s347 + $0xc] sm:$0xff]
      %v1480 = vld [vmem:[%s347 + $0x1c] sm:$0xff]
      %v1481 = vld [vmem:[%s347 + $0x24] sm:$0xff]
      %v1482 = vld [vmem:[#allocation2 + $0x60] sm:$0xff]
      %v1483 = vld [vmem:[#allocation2 + $0x68] sm:$0xff]
      %v1484 = vld [vmem:[#allocation2 + $0x70] sm:$0xff]
      %v1485 = vld [vmem:[#allocation2 + $0x78] sm:$0xff]
      %v1487 = vsel %vm423, %v1478, 0
      %v1490 = vsel %vm423, %v1479, 0
      %v1493 = vsel %vm423, %v1480, 0
      %v1496 = vsel %vm423, %v1481, 0
      %1498 = vmatpush.msra.mxu0 0.0
      %1499 = vmatpush.msra.mxu0 0.0
      %1500 = vmatpush.msra.mxu0 0.0
      %1501 = vmatpush.msra.mxu0 0.0
      %1502 = vmatpush.msra.mxu0 0.0
      %1503 = vmatpush.msra.mxu0 0.0
      %1504 = vmatpush.msra.mxu0 0.0
      %1505 = vmatpush.msra.mxu0 0.0
      %1506 = vmatpush.msra.mxu0 0.0
      %1507 = vmatpush.msra.mxu0 0.0
      %1508 = vmatpush.msra.mxu0 0.0
      %1509 = vmatpush.msra.mxu0 0.0
      %1510 = vmatpush.msra.mxu0 0.0
      %1511 = vmatpush.msra.mxu0 0.0
      %1512 = vmatpush.msra.mxu0 0.0
      %1513 = vmatpush.msra.mxu0 %v1399
      %1514 = vmatmul.f32.gmra.mxu0 %v1487
      %v1515 = vpop.f32.mrf.mxu0
      %v1516 = vadd.f32 0.0, %v1515
      %1517 = vmatmul.f32.gmra.mxu0 %v1490
      %v1518 = vpop.f32.mrf.mxu0
      %v1519 = vadd.f32 0.0, %v1518
      %1520 = vmatmul.f32.gmra.mxu0 %v1493
      %v1521 = vpop.f32.mrf.mxu0
      %v1522 = vadd.f32 0.0, %v1521
      %1523 = vmatmul.f32.gmra.mxu0 %v1496
      %v1524 = vpop.f32.mrf.mxu0
      %v1525 = vadd.f32 0.0, %v1524
      %1526 = vdwg.mxu0
      %v1527 = vadd.f32 %v1482, %v1516
      %v1528 = vadd.f32 %v1483, %v1519
      %v1529 = vadd.f32 %v1484, %v1522
      %v1530 = vadd.f32 %v1485, %v1525
      %1531 = vst [vmem:[#allocation2 + $0x60] sm:$0xff] %v1527
      %1532 = vst [vmem:[#allocation2 + $0x68] sm:$0xff] %v1528
      %1533 = vst [vmem:[#allocation2 + $0x70] sm:$0xff] %v1529
      %1534 = vst [vmem:[#allocation2 + $0x78] sm:$0xff] %v1530
      %s1535 = scalar_lea.vmem %s354, 24
      %v1536 = vld [vmem:[%s1535] sm:$0xf]
      %s1537 = scalar_lea.vmem %s326, 96
      %v1538 = vld [vmem:[%s1537] sm:$0xff]
      %v1539 = vld [vmem:[%s1537 + $0x8] sm:$0xff]
      %v1540 = vld [vmem:[%s1537 + $0x18] sm:$0xff]
      %v1541 = vld [vmem:[%s1537 + $0x20] sm:$0xff]
      %v1542 = vld [vmem:[%s1537 + $0x30] sm:$0xff]
      %v1543 = vld [vmem:[%s1537 + $0x38] sm:$0xff]
      %v1544 = vld [vmem:[%s1537 + $0x48] sm:$0xff]
      %v1545 = vld [vmem:[%s1537 + $0x50] sm:$0xff]
      %v1546 = vld [vmem:[#allocation2] sm:$0xff]
      %v1547 = vld [vmem:[#allocation2 + $0x8] sm:$0xff]
      %v1548 = vld [vmem:[#allocation2 + $0x10] sm:$0xff]
      %v1549 = vld [vmem:[#allocation2 + $0x18] sm:$0xff]
      %v1550 = vld [vmem:[#allocation2 + $0x20] sm:$0xff]
      %v1551 = vld [vmem:[#allocation2 + $0x28] sm:$0xff]
      %v1552 = vld [vmem:[#allocation2 + $0x30] sm:$0xff]
      %v1553 = vld [vmem:[#allocation2 + $0x38] sm:$0xff]
      %v1555 = vsel %vm423, %v1538, 0
      %v1558 = vsel %vm423, %v1539, 0
      %v1561 = vsel %vm423, %v1540, 0
      %v1564 = vsel %vm423, %v1541, 0
      %v1567 = vsel %vm423, %v1542, 0
      %v1570 = vsel %vm423, %v1543, 0
      %v1573 = vsel %vm423, %v1544, 0
      %v1576 = vsel %vm423, %v1545, 0
      %v1579 = vsel %vm472, %v1536, 0
      %1581 = vmatpush.msra.mxu0 0.0
      %1582 = vmatpush.msra.mxu0 0.0
      %1583 = vmatpush.msra.mxu0 0.0
      %1584 = vmatpush.msra.mxu0 0.0
      %1585 = vmatpush.msra.mxu0 0.0
      %1586 = vmatpush.msra.mxu0 0.0
      %1587 = vmatpush.msra.mxu0 0.0
      %1588 = vmatpush.msra.mxu0 0.0
      %1589 = vmatpush.msra.mxu0 0.0
      %1590 = vmatpush.msra.mxu0 0.0
      %1591 = vmatpush.msra.mxu0 0.0
      %1592 = vmatpush.msra.mxu0 0.0
      %1593 = vmatpush.msra.mxu0 0.0
      %1594 = vmatpush.msra.mxu0 0.0
      %1595 = vmatpush.msra.mxu0 0.0
      %1596 = vmatpush.msra.mxu0 %v1579
      %1597 = vmatmul.f32.gmra.mxu0 %v1555
      %v1598 = vpop.f32.mrf.mxu0
      %v1599 = vadd.f32 0.0, %v1598
      %1600 = vmatmul.f32.gmra.mxu0 %v1558
      %v1601 = vpop.f32.mrf.mxu0
      %v1602 = vadd.f32 0.0, %v1601
      %1603 = vmatmul.f32.gmra.mxu0 %v1561
      %v1604 = vpop.f32.mrf.mxu0
      %v1605 = vadd.f32 0.0, %v1604
      %1606 = vmatmul.f32.gmra.mxu0 %v1564
      %v1607 = vpop.f32.mrf.mxu0
      %v1608 = vadd.f32 0.0, %v1607
      %1609 = vmatmul.f32.gmra.mxu0 %v1567
      %v1610 = vpop.f32.mrf.mxu0
      %v1611 = vadd.f32 0.0, %v1610
      %1612 = vmatmul.f32.gmra.mxu0 %v1570
      %v1613 = vpop.f32.mrf.mxu0
      %v1614 = vadd.f32 0.0, %v1613
      %1615 = vmatmul.f32.gmra.mxu0 %v1573
      %v1616 = vpop.f32.mrf.mxu0
      %v1617 = vadd.f32 0.0, %v1616
      %1618 = vmatmul.f32.gmra.mxu0 %v1576
      %v1619 = vpop.f32.mrf.mxu0
      %v1620 = vadd.f32 0.0, %v1619
      %1621 = vdwg.mxu0
      %v1622 = vadd.f32 %v1546, %v1599
      %v1623 = vadd.f32 %v1547, %v1602
      %v1624 = vadd.f32 %v1548, %v1605
      %v1625 = vadd.f32 %v1549, %v1608
      %v1626 = vadd.f32 %v1550, %v1611
      %v1627 = vadd.f32 %v1551, %v1614
      %v1628 = vadd.f32 %v1552, %v1617
      %v1629 = vadd.f32 %v1553, %v1620
      %1630 = vst [vmem:[#allocation2] sm:$0xff] %v1622
      %1631 = vst [vmem:[#allocation2 + $0x8] sm:$0xff] %v1623
      %1632 = vst [vmem:[#allocation2 + $0x10] sm:$0xff] %v1624
      %1633 = vst [vmem:[#allocation2 + $0x18] sm:$0xff] %v1625
      %1634 = vst [vmem:[#allocation2 + $0x20] sm:$0xff] %v1626
      %1635 = vst [vmem:[#allocation2 + $0x28] sm:$0xff] %v1627
      %1636 = vst [vmem:[#allocation2 + $0x30] sm:$0xff] %v1628
      %1637 = vst [vmem:[#allocation2 + $0x38] sm:$0xff] %v1629
      %v1638 = vld [vmem:[%s347] sm:$0xff]
      %v1639 = vld [vmem:[%s347 + $0x8] sm:$0xff]
      %v1640 = vld [vmem:[%s347 + $0x18] sm:$0xff]
      %v1641 = vld [vmem:[%s347 + $0x20] sm:$0xff]
      %v1642 = vld [vmem:[%s347 + $0x30] sm:$0xff]
      %v1643 = vld [vmem:[%s347 + $0x38] sm:$0xff]
      %v1644 = vld [vmem:[%s347 + $0x48] sm:$0xff]
      %v1645 = vld [vmem:[%s347 + $0x50] sm:$0xff]
      %v1646 = vld [vmem:[#allocation2 + $0x40] sm:$0xff]
      %v1647 = vld [vmem:[#allocation2 + $0x48] sm:$0xff]
      %v1648 = vld [vmem:[#allocation2 + $0x50] sm:$0xff]
      %v1649 = vld [vmem:[#allocation2 + $0x58] sm:$0xff]
      %v1650 = vld [vmem:[#allocation2 + $0x60] sm:$0xff]
      %v1651 = vld [vmem:[#allocation2 + $0x68] sm:$0xff]
      %v1652 = vld [vmem:[#allocation2 + $0x70] sm:$0xff]
      %v1653 = vld [vmem:[#allocation2 + $0x78] sm:$0xff]
      %v1655 = vsel %vm423, %v1638, 0
      %v1658 = vsel %vm423, %v1639, 0
      %v1661 = vsel %vm423, %v1640, 0
      %v1664 = vsel %vm423, %v1641, 0
      %v1667 = vsel %vm423, %v1642, 0
      %v1670 = vsel %vm423, %v1643, 0
      %v1673 = vsel %vm423, %v1644, 0
      %v1676 = vsel %vm423, %v1645, 0
      %1678 = vmatpush.msra.mxu0 0.0
      %1679 = vmatpush.msra.mxu0 0.0
      %1680 = vmatpush.msra.mxu0 0.0
      %1681 = vmatpush.msra.mxu0 0.0
      %1682 = vmatpush.msra.mxu0 0.0
      %1683 = vmatpush.msra.mxu0 0.0
      %1684 = vmatpush.msra.mxu0 0.0
      %1685 = vmatpush.msra.mxu0 0.0
      %1686 = vmatpush.msra.mxu0 0.0
      %1687 = vmatpush.msra.mxu0 0.0
      %1688 = vmatpush.msra.mxu0 0.0
      %1689 = vmatpush.msra.mxu0 0.0
      %1690 = vmatpush.msra.mxu0 0.0
      %1691 = vmatpush.msra.mxu0 0.0
      %1692 = vmatpush.msra.mxu0 0.0
      %1693 = vmatpush.msra.mxu0 %v1579
      %1694 = vmatmul.f32.gmra.mxu0 %v1655
      %v1695 = vpop.f32.mrf.mxu0
      %v1696 = vadd.f32 0.0, %v1695
      %1697 = vmatmul.f32.gmra.mxu0 %v1658
      %v1698 = vpop.f32.mrf.mxu0
      %v1699 = vadd.f32 0.0, %v1698
      %1700 = vmatmul.f32.gmra.mxu0 %v1661
      %v1701 = vpop.f32.mrf.mxu0
      %v1702 = vadd.f32 0.0, %v1701
      %1703 = vmatmul.f32.gmra.mxu0 %v1664
      %v1704 = vpop.f32.mrf.mxu0
      %v1705 = vadd.f32 0.0, %v1704
      %1706 = vmatmul.f32.gmra.mxu0 %v1667
      %v1707 = vpop.f32.mrf.mxu0
      %v1708 = vadd.f32 0.0, %v1707
      %1709 = vmatmul.f32.gmra.mxu0 %v1670
      %v1710 = vpop.f32.mrf.mxu0
      %v1711 = vadd.f32 0.0, %v1710
      %1712 = vmatmul.f32.gmra.mxu0 %v1673
      %v1713 = vpop.f32.mrf.mxu0
      %v1714 = vadd.f32 0.0, %v1713
      %1715 = vmatmul.f32.gmra.mxu0 %v1676
      %v1716 = vpop.f32.mrf.mxu0
      %v1717 = vadd.f32 0.0, %v1716
      %1718 = vdwg.mxu0
      %v1719 = vadd.f32 %v1646, %v1696
      %v1720 = vadd.f32 %v1647, %v1699
      %v1721 = vadd.f32 %v1648, %v1702
      %v1722 = vadd.f32 %v1649, %v1705
      %v1723 = vadd.f32 %v1650, %v1708
      %v1724 = vadd.f32 %v1651, %v1711
      %v1725 = vadd.f32 %v1652, %v1714
      %v1726 = vadd.f32 %v1653, %v1717
      %1727 = vst [vmem:[#allocation2 + $0x40] sm:$0xff] %v1719
      %1728 = vst [vmem:[#allocation2 + $0x48] sm:$0xff] %v1720
      %1729 = vst [vmem:[#allocation2 + $0x50] sm:$0xff] %v1721
      %1730 = vst [vmem:[#allocation2 + $0x58] sm:$0xff] %v1722
      %1731 = vst [vmem:[#allocation2 + $0x60] sm:$0xff] %v1723
      %1732 = vst [vmem:[#allocation2 + $0x68] sm:$0xff] %v1724
      %1733 = vst [vmem:[#allocation2 + $0x70] sm:$0xff] %v1725
      %1734 = vst [vmem:[#allocation2 + $0x78] sm:$0xff] %v1726
      %s1735 = scalar_lea.vmem %s354, 28
      %v1736 = vld [vmem:[%s1735] sm:$0xf]
      %v1737 = vld [vmem:[%s1537 + $0x2] sm:$0xff]
      %v1738 = vld [vmem:[%s1537 + $0xa] sm:$0xff]
      %v1739 = vld [vmem:[%s1537 + $0x1a] sm:$0xff]
      %v1740 = vld [vmem:[%s1537 + $0x22] sm:$0xff]
      %v1741 = vld [vmem:[%s1537 + $0x32] sm:$0xff]
      %v1742 = vld [vmem:[%s1537 + $0x3a] sm:$0xff]
      %v1743 = vld [vmem:[%s1537 + $0x4a] sm:$0xff]
      %v1744 = vld [vmem:[%s1537 + $0x52] sm:$0xff]
      %v1745 = vld [vmem:[#allocation2] sm:$0xff]
      %v1746 = vld [vmem:[#allocation2 + $0x8] sm:$0xff]
      %v1747 = vld [vmem:[#allocation2 + $0x10] sm:$0xff]
      %v1748 = vld [vmem:[#allocation2 + $0x18] sm:$0xff]
      %v1749 = vld [vmem:[#allocation2 + $0x20] sm:$0xff]
      %v1750 = vld [vmem:[#allocation2 + $0x28] sm:$0xff]
      %v1751 = vld [vmem:[#allocation2 + $0x30] sm:$0xff]
      %v1752 = vld [vmem:[#allocation2 + $0x38] sm:$0xff]
      %v1754 = vsel %vm423, %v1737, 0
      %v1757 = vsel %vm423, %v1738, 0
      %v1760 = vsel %vm423, %v1739, 0
      %v1763 = vsel %vm423, %v1740, 0
      %v1766 = vsel %vm423, %v1741, 0
      %v1769 = vsel %vm423, %v1742, 0
      %v1772 = vsel %vm423, %v1743, 0
      %v1775 = vsel %vm423, %v1744, 0
      %v1778 = vsel %vm472, %v1736, 0
      %1780 = vmatpush.msra.mxu0 0.0
      %1781 = vmatpush.msra.mxu0 0.0
      %1782 = vmatpush.msra.mxu0 0.0
      %1783 = vmatpush.msra.mxu0 0.0
      %1784 = vmatpush.msra.mxu0 0.0
      %1785 = vmatpush.msra.mxu0 0.0
      %1786 = vmatpush.msra.mxu0 0.0
      %1787 = vmatpush.msra.mxu0 0.0
      %1788 = vmatpush.msra.mxu0 0.0
      %1789 = vmatpush.msra.mxu0 0.0
      %1790 = vmatpush.msra.mxu0 0.0
      %1791 = vmatpush.msra.mxu0 0.0
      %1792 = vmatpush.msra.mxu0 0.0
      %1793 = vmatpush.msra.mxu0 0.0
      %1794 = vmatpush.msra.mxu0 0.0
      %1795 = vmatpush.msra.mxu0 %v1778
      %1796 = vmatmul.f32.gmra.mxu0 %v1754
      %v1797 = vpop.f32.mrf.mxu0
      %v1798 = vadd.f32 0.0, %v1797
      %1799 = vmatmul.f32.gmra.mxu0 %v1757
      %v1800 = vpop.f32.mrf.mxu0
      %v1801 = vadd.f32 0.0, %v1800
      %1802 = vmatmul.f32.gmra.mxu0 %v1760
      %v1803 = vpop.f32.mrf.mxu0
      %v1804 = vadd.f32 0.0, %v1803
      %1805 = vmatmul.f32.gmra.mxu0 %v1763
      %v1806 = vpop.f32.mrf.mxu0
      %v1807 = vadd.f32 0.0, %v1806
      %1808 = vmatmul.f32.gmra.mxu0 %v1766
      %v1809 = vpop.f32.mrf.mxu0
      %v1810 = vadd.f32 0.0, %v1809
      %1811 = vmatmul.f32.gmra.mxu0 %v1769
      %v1812 = vpop.f32.mrf.mxu0
      %v1813 = vadd.f32 0.0, %v1812
      %1814 = vmatmul.f32.gmra.mxu0 %v1772
      %v1815 = vpop.f32.mrf.mxu0
      %v1816 = vadd.f32 0.0, %v1815
      %1817 = vmatmul.f32.gmra.mxu0 %v1775
      %v1818 = vpop.f32.mrf.mxu0
      %v1819 = vadd.f32 0.0, %v1818
      %1820 = vdwg.mxu0
      %v1821 = vadd.f32 %v1745, %v1798
      %v1822 = vadd.f32 %v1746, %v1801
      %v1823 = vadd.f32 %v1747, %v1804
      %v1824 = vadd.f32 %v1748, %v1807
      %v1825 = vadd.f32 %v1749, %v1810
      %v1826 = vadd.f32 %v1750, %v1813
      %v1827 = vadd.f32 %v1751, %v1816
      %v1828 = vadd.f32 %v1752, %v1819
      %1829 = vst [vmem:[#allocation2] sm:$0xff] %v1821
      %1830 = vst [vmem:[#allocation2 + $0x8] sm:$0xff] %v1822
      %1831 = vst [vmem:[#allocation2 + $0x10] sm:$0xff] %v1823
      %1832 = vst [vmem:[#allocation2 + $0x18] sm:$0xff] %v1824
      %1833 = vst [vmem:[#allocation2 + $0x20] sm:$0xff] %v1825
      %1834 = vst [vmem:[#allocation2 + $0x28] sm:$0xff] %v1826
      %1835 = vst [vmem:[#allocation2 + $0x30] sm:$0xff] %v1827
      %1836 = vst [vmem:[#allocation2 + $0x38] sm:$0xff] %v1828
      %v1837 = vld [vmem:[%s347 + $0x2] sm:$0xff]
      %v1838 = vld [vmem:[%s347 + $0xa] sm:$0xff]
      %v1839 = vld [vmem:[%s347 + $0x1a] sm:$0xff]
      %v1840 = vld [vmem:[%s347 + $0x22] sm:$0xff]
      %v1841 = vld [vmem:[%s347 + $0x32] sm:$0xff]
      %v1842 = vld [vmem:[%s347 + $0x3a] sm:$0xff]
      %v1843 = vld [vmem:[%s347 + $0x4a] sm:$0xff]
      %v1844 = vld [vmem:[%s347 + $0x52] sm:$0xff]
      %v1845 = vld [vmem:[#allocation2 + $0x40] sm:$0xff]
      %v1846 = vld [vmem:[#allocation2 + $0x48] sm:$0xff]
      %v1847 = vld [vmem:[#allocation2 + $0x50] sm:$0xff]
      %v1848 = vld [vmem:[#allocation2 + $0x58] sm:$0xff]
      %v1849 = vld [vmem:[#allocation2 + $0x60] sm:$0xff]
      %v1850 = vld [vmem:[#allocation2 + $0x68] sm:$0xff]
      %v1851 = vld [vmem:[#allocation2 + $0x70] sm:$0xff]
      %v1852 = vld [vmem:[#allocation2 + $0x78] sm:$0xff]
      %v1854 = vsel %vm423, %v1837, 0
      %v1857 = vsel %vm423, %v1838, 0
      %v1860 = vsel %vm423, %v1839, 0
      %v1863 = vsel %vm423, %v1840, 0
      %v1866 = vsel %vm423, %v1841, 0
      %v1869 = vsel %vm423, %v1842, 0
      %v1872 = vsel %vm423, %v1843, 0
      %v1875 = vsel %vm423, %v1844, 0
      %1877 = vmatpush.msra.mxu0 0.0
      %1878 = vmatpush.msra.mxu0 0.0
      %1879 = vmatpush.msra.mxu0 0.0
      %1880 = vmatpush.msra.mxu0 0.0
      %1881 = vmatpush.msra.mxu0 0.0
      %1882 = vmatpush.msra.mxu0 0.0
      %1883 = vmatpush.msra.mxu0 0.0
      %1884 = vmatpush.msra.mxu0 0.0
      %1885 = vmatpush.msra.mxu0 0.0
      %1886 = vmatpush.msra.mxu0 0.0
      %1887 = vmatpush.msra.mxu0 0.0
      %1888 = vmatpush.msra.mxu0 0.0
      %1889 = vmatpush.msra.mxu0 0.0
      %1890 = vmatpush.msra.mxu0 0.0
      %1891 = vmatpush.msra.mxu0 0.0
      %1892 = vmatpush.msra.mxu0 %v1778
      %1893 = vmatmul.f32.gmra.mxu0 %v1854
      %v1894 = vpop.f32.mrf.mxu0
      %v1895 = vadd.f32 0.0, %v1894
      %1896 = vmatmul.f32.gmra.mxu0 %v1857
      %v1897 = vpop.f32.mrf.mxu0
      %v1898 = vadd.f32 0.0, %v1897
      %1899 = vmatmul.f32.gmra.mxu0 %v1860
      %v1900 = vpop.f32.mrf.mxu0
      %v1901 = vadd.f32 0.0, %v1900
      %1902 = vmatmul.f32.gmra.mxu0 %v1863
      %v1903 = vpop.f32.mrf.mxu0
      %v1904 = vadd.f32 0.0, %v1903
      %1905 = vmatmul.f32.gmra.mxu0 %v1866
      %v1906 = vpop.f32.mrf.mxu0
      %v1907 = vadd.f32 0.0, %v1906
      %1908 = vmatmul.f32.gmra.mxu0 %v1869
      %v1909 = vpop.f32.mrf.mxu0
      %v1910 = vadd.f32 0.0, %v1909
      %1911 = vmatmul.f32.gmra.mxu0 %v1872
      %v1912 = vpop.f32.mrf.mxu0
      %v1913 = vadd.f32 0.0, %v1912
      %1914 = vmatmul.f32.gmra.mxu0 %v1875
      %v1915 = vpop.f32.mrf.mxu0
      %v1916 = vadd.f32 0.0, %v1915
      %1917 = vdwg.mxu0
      %v1918 = vadd.f32 %v1845, %v1895
      %v1919 = vadd.f32 %v1846, %v1898
      %v1920 = vadd.f32 %v1847, %v1901
      %v1921 = vadd.f32 %v1848, %v1904
      %v1922 = vadd.f32 %v1849, %v1907
      %v1923 = vadd.f32 %v1850, %v1910
      %v1924 = vadd.f32 %v1851, %v1913
      %v1925 = vadd.f32 %v1852, %v1916
      %1926 = vst [vmem:[#allocation2 + $0x40] sm:$0xff] %v1918
      %1927 = vst [vmem:[#allocation2 + $0x48] sm:$0xff] %v1919
      %1928 = vst [vmem:[#allocation2 + $0x50] sm:$0xff] %v1920
      %1929 = vst [vmem:[#allocation2 + $0x58] sm:$0xff] %v1921
      %1930 = vst [vmem:[#allocation2 + $0x60] sm:$0xff] %v1922
      %1931 = vst [vmem:[#allocation2 + $0x68] sm:$0xff] %v1923
      %1932 = vst [vmem:[#allocation2 + $0x70] sm:$0xff] %v1924
      %1933 = vst [vmem:[#allocation2 + $0x78] sm:$0xff] %v1925
      %s1934 = scalar_lea.vmem %s354, 32
      %v1935 = vld [vmem:[%s1934] sm:$0xf]
      %v1936 = vld [vmem:[%s1537 + $0x4] sm:$0xff]
      %v1937 = vld [vmem:[%s1537 + $0xc] sm:$0xff]
      %v1938 = vld [vmem:[%s1537 + $0x1c] sm:$0xff]
      %v1939 = vld [vmem:[%s1537 + $0x24] sm:$0xff]
      %v1940 = vld [vmem:[%s1537 + $0x34] sm:$0xff]
      %v1941 = vld [vmem:[%s1537 + $0x3c] sm:$0xff]
      %v1942 = vld [vmem:[%s1537 + $0x4c] sm:$0xff]
      %v1943 = vld [vmem:[%s1537 + $0x54] sm:$0xff]
      %v1944 = vld [vmem:[#allocation2] sm:$0xff]
      %v1945 = vld [vmem:[#allocation2 + $0x8] sm:$0xff]
      %v1946 = vld [vmem:[#allocation2 + $0x10] sm:$0xff]
      %v1947 = vld [vmem:[#allocation2 + $0x18] sm:$0xff]
      %v1948 = vld [vmem:[#allocation2 + $0x20] sm:$0xff]
      %v1949 = vld [vmem:[#allocation2 + $0x28] sm:$0xff]
      %v1950 = vld [vmem:[#allocation2 + $0x30] sm:$0xff]
      %v1951 = vld [vmem:[#allocation2 + $0x38] sm:$0xff]
      %v1953 = vsel %vm423, %v1936, 0
      %v1956 = vsel %vm423, %v1937, 0
      %v1959 = vsel %vm423, %v1938, 0
      %v1962 = vsel %vm423, %v1939, 0
      %v1965 = vsel %vm423, %v1940, 0
      %v1968 = vsel %vm423, %v1941, 0
      %v1971 = vsel %vm423, %v1942, 0
      %v1974 = vsel %vm423, %v1943, 0
      %v1977 = vsel %vm472, %v1935, 0
      %1979 = vmatpush.msra.mxu0 0.0
      %1980 = vmatpush.msra.mxu0 0.0
      %1981 = vmatpush.msra.mxu0 0.0
      %1982 = vmatpush.msra.mxu0 0.0
      %1983 = vmatpush.msra.mxu0 0.0
      %1984 = vmatpush.msra.mxu0 0.0
      %1985 = vmatpush.msra.mxu0 0.0
      %1986 = vmatpush.msra.mxu0 0.0
      %1987 = vmatpush.msra.mxu0 0.0
      %1988 = vmatpush.msra.mxu0 0.0
      %1989 = vmatpush.msra.mxu0 0.0
      %1990 = vmatpush.msra.mxu0 0.0
      %1991 = vmatpush.msra.mxu0 0.0
      %1992 = vmatpush.msra.mxu0 0.0
      %1993 = vmatpush.msra.mxu0 0.0
      %1994 = vmatpush.msra.mxu0 %v1977
      %1995 = vmatmul.f32.gmra.mxu0 %v1953
      %v1996 = vpop.f32.mrf.mxu0
      %v1997 = vadd.f32 0.0, %v1996
      %1998 = vmatmul.f32.gmra.mxu0 %v1956
      %v1999 = vpop.f32.mrf.mxu0
      %v2000 = vadd.f32 0.0, %v1999
      %2001 = vmatmul.f32.gmra.mxu0 %v1959
      %v2002 = vpop.f32.mrf.mxu0
      %v2003 = vadd.f32 0.0, %v2002
      %2004 = vmatmul.f32.gmra.mxu0 %v1962
      %v2005 = vpop.f32.mrf.mxu0
      %v2006 = vadd.f32 0.0, %v2005
      %2007 = vmatmul.f32.gmra.mxu0 %v1965
      %v2008 = vpop.f32.mrf.mxu0
      %v2009 = vadd.f32 0.0, %v2008
      %2010 = vmatmul.f32.gmra.mxu0 %v1968
      %v2011 = vpop.f32.mrf.mxu0
      %v2012 = vadd.f32 0.0, %v2011
      %2013 = vmatmul.f32.gmra.mxu0 %v1971
      %v2014 = vpop.f32.mrf.mxu0
      %v2015 = vadd.f32 0.0, %v2014
      %2016 = vmatmul.f32.gmra.mxu0 %v1974
      %v2017 = vpop.f32.mrf.mxu0
      %v2018 = vadd.f32 0.0, %v2017
      %2019 = vdwg.mxu0
      %v2020 = vadd.f32 %v1944, %v1997
      %v2021 = vadd.f32 %v1945, %v2000
      %v2022 = vadd.f32 %v1946, %v2003
      %v2023 = vadd.f32 %v1947, %v2006
      %v2024 = vadd.f32 %v1948, %v2009
      %v2025 = vadd.f32 %v1949, %v2012
      %v2026 = vadd.f32 %v1950, %v2015
      %v2027 = vadd.f32 %v1951, %v2018
      %2028 = vst [vmem:[#allocation2] sm:$0xff] %v2020
      %2029 = vst [vmem:[#allocation2 + $0x8] sm:$0xff] %v2021
      %2030 = vst [vmem:[#allocation2 + $0x10] sm:$0xff] %v2022
      %2031 = vst [vmem:[#allocation2 + $0x18] sm:$0xff] %v2023
      %2032 = vst [vmem:[#allocation2 + $0x20] sm:$0xff] %v2024
      %2033 = vst [vmem:[#allocation2 + $0x28] sm:$0xff] %v2025
      %2034 = vst [vmem:[#allocation2 + $0x30] sm:$0xff] %v2026
      %2035 = vst [vmem:[#allocation2 + $0x38] sm:$0xff] %v2027
      %v2036 = vld [vmem:[%s347 + $0x4] sm:$0xff]
      %v2037 = vld [vmem:[%s347 + $0xc] sm:$0xff]
      %v2038 = vld [vmem:[%s347 + $0x1c] sm:$0xff]
      %v2039 = vld [vmem:[%s347 + $0x24] sm:$0xff]
      %v2040 = vld [vmem:[%s347 + $0x34] sm:$0xff]
      %v2041 = vld [vmem:[%s347 + $0x3c] sm:$0xff]
      %v2042 = vld [vmem:[%s347 + $0x4c] sm:$0xff]
      %v2043 = vld [vmem:[%s347 + $0x54] sm:$0xff]
      %v2044 = vld [vmem:[#allocation2 + $0x40] sm:$0xff]
      %v2045 = vld [vmem:[#allocation2 + $0x48] sm:$0xff]
      %v2046 = vld [vmem:[#allocation2 + $0x50] sm:$0xff]
      %v2047 = vld [vmem:[#allocation2 + $0x58] sm:$0xff]
      %v2048 = vld [vmem:[#allocation2 + $0x60] sm:$0xff]
      %v2049 = vld [vmem:[#allocation2 + $0x68] sm:$0xff]
      %v2050 = vld [vmem:[#allocation2 + $0x70] sm:$0xff]
      %v2051 = vld [vmem:[#allocation2 + $0x78] sm:$0xff]
      %v2053 = vsel %vm423, %v2036, 0
      %v2056 = vsel %vm423, %v2037, 0
      %v2059 = vsel %vm423, %v2038, 0
      %v2062 = vsel %vm423, %v2039, 0
      %v2065 = vsel %vm423, %v2040, 0
      %v2068 = vsel %vm423, %v2041, 0
      %v2071 = vsel %vm423, %v2042, 0
      %v2074 = vsel %vm423, %v2043, 0
      %2076 = vmatpush.msra.mxu0 0.0
      %2077 = vmatpush.msra.mxu0 0.0
      %2078 = vmatpush.msra.mxu0 0.0
      %2079 = vmatpush.msra.mxu0 0.0
      %2080 = vmatpush.msra.mxu0 0.0
      %2081 = vmatpush.msra.mxu0 0.0
      %2082 = vmatpush.msra.mxu0 0.0
      %2083 = vmatpush.msra.mxu0 0.0
      %2084 = vmatpush.msra.mxu0 0.0
      %2085 = vmatpush.msra.mxu0 0.0
      %2086 = vmatpush.msra.mxu0 0.0
      %2087 = vmatpush.msra.mxu0 0.0
      %2088 = vmatpush.msra.mxu0 0.0
      %2089 = vmatpush.msra.mxu0 0.0
      %2090 = vmatpush.msra.mxu0 0.0
      %2091 = vmatpush.msra.mxu0 %v1977
      %2092 = vmatmul.f32.gmra.mxu0 %v2053
      %v2093 = vpop.f32.mrf.mxu0
      %v2094 = vadd.f32 0.0, %v2093
      %2095 = vmatmul.f32.gmra.mxu0 %v2056
      %v2096 = vpop.f32.mrf.mxu0
      %v2097 = vadd.f32 0.0, %v2096
      %2098 = vmatmul.f32.gmra.mxu0 %v2059
      %v2099 = vpop.f32.mrf.mxu0
      %v2100 = vadd.f32 0.0, %v2099
      %2101 = vmatmul.f32.gmra.mxu0 %v2062
      %v2102 = vpop.f32.mrf.mxu0
      %v2103 = vadd.f32 0.0, %v2102
      %2104 = vmatmul.f32.gmra.mxu0 %v2065
      %v2105 = vpop.f32.mrf.mxu0
      %v2106 = vadd.f32 0.0, %v2105
      %2107 = vmatmul.f32.gmra.mxu0 %v2068
      %v2108 = vpop.f32.mrf.mxu0
      %v2109 = vadd.f32 0.0, %v2108
      %2110 = vmatmul.f32.gmra.mxu0 %v2071
      %v2111 = vpop.f32.mrf.mxu0
      %v2112 = vadd.f32 0.0, %v2111
      %2113 = vmatmul.f32.gmra.mxu0 %v2074
      %v2114 = vpop.f32.mrf.mxu0
      %v2115 = vadd.f32 0.0, %v2114
      %2116 = vdwg.mxu0
      %v2117 = vadd.f32 %v2044, %v2094
      %v2118 = vadd.f32 %v2045, %v2097
      %v2119 = vadd.f32 %v2046, %v2100
      %v2120 = vadd.f32 %v2047, %v2103
      %v2121 = vadd.f32 %v2048, %v2106
      %v2122 = vadd.f32 %v2049, %v2109
      %v2123 = vadd.f32 %v2050, %v2112
      %v2124 = vadd.f32 %v2051, %v2115
      %2125 = vst [vmem:[#allocation2 + $0x40] sm:$0xff] %v2117
      %2126 = vst [vmem:[#allocation2 + $0x48] sm:$0xff] %v2118
      %2127 = vst [vmem:[#allocation2 + $0x50] sm:$0xff] %v2119
      %2128 = vst [vmem:[#allocation2 + $0x58] sm:$0xff] %v2120
      %2129 = vst [vmem:[#allocation2 + $0x60] sm:$0xff] %v2121
      %2130 = vst [vmem:[#allocation2 + $0x68] sm:$0xff] %v2122
      %2131 = vst [vmem:[#allocation2 + $0x70] sm:$0xff] %v2123
      %2132 = vst [vmem:[#allocation2 + $0x78] sm:$0xff] %v2124
      // Predicated region
      $region41: #{aspp_forward.1} parent=35 // pred_check
        %p2133 = pneg %p366
      $region42: #{aspp_forward.1} parent=35 // pred_check_branch
        %2135 = sbr.rel (%p2133) target = $region44
      $region43: #{aspp_forward.1} parent=35 // pred_region
        %v2136 = vld [vmem:[#allocation2] sm:$0xff]
        %v2137 = vld [vmem:[#allocation2 + $0x8] sm:$0xff]
        %v2138 = vld [vmem:[#allocation2 + $0x10] sm:$0xff]
        %v2139 = vld [vmem:[#allocation2 + $0x18] sm:$0xff]
        %v2140 = vld [vmem:[#allocation2 + $0x20] sm:$0xff]
        %v2141 = vld [vmem:[#allocation2 + $0x28] sm:$0xff]
        %v2142 = vld [vmem:[#allocation2 + $0x30] sm:$0xff]
        %v2143 = vld [vmem:[#allocation2 + $0x38] sm:$0xff]
        %v2144 = vld [vmem:[#allocation2 + $0x40] sm:$0xff]
        %v2145 = vld [vmem:[#allocation2 + $0x48] sm:$0xff]
        %v2146 = vld [vmem:[#allocation2 + $0x50] sm:$0xff]
        %v2147 = vld [vmem:[#allocation2 + $0x58] sm:$0xff]
        %v2148 = vld [vmem:[#allocation2 + $0x60] sm:$0xff]
        %v2149 = vld [vmem:[#allocation2 + $0x68] sm:$0xff]
        %v2150 = vld [vmem:[#allocation2 + $0x70] sm:$0xff]
        %v2151 = vld [vmem:[#allocation2 + $0x78] sm:$0xff]
        %v2152 = vmax.f32 %v2136, 0.0
        %v2153 = vmax.f32 %v2137, 0.0
        %v2154 = vmax.f32 %v2138, 0.0
        %v2155 = vmax.f32 %v2139, 0.0
        %v2156 = vmax.f32 %v2140, 0.0
        %v2157 = vmax.f32 %v2141, 0.0
        %v2158 = vmax.f32 %v2142, 0.0
        %v2159 = vmax.f32 %v2143, 0.0
        %v2160 = vmax.f32 %v2144, 0.0
        %v2161 = vmax.f32 %v2145, 0.0
        %v2162 = vmax.f32 %v2146, 0.0
        %v2163 = vmax.f32 %v2147, 0.0
        %v2164 = vmax.f32 %v2148, 0.0
        %v2165 = vmax.f32 %v2149, 0.0
        %v2166 = vmax.f32 %v2150, 0.0
        %v2167 = vmax.f32 %v2151, 0.0
        %2168 = vst [vmem:[%s364] sm:$0xff] %v2152
        %2169 = vst [vmem:[%s364 + $0x8] sm:$0xff] %v2153
        %2170 = vst [vmem:[%s364 + $0x10] sm:$0xff] %v2154
        %2171 = vst [vmem:[%s364 + $0x18] sm:$0xff] %v2155
        %2172 = vst [vmem:[%s364 + $0x20] sm:$0xff] %v2156
        %2173 = vst [vmem:[%s364 + $0x28] sm:$0xff] %v2157
        %2174 = vst [vmem:[%s364 + $0x30] sm:$0xff] %v2158
        %2175 = vst [vmem:[%s364 + $0x38] sm:$0xff] %v2159
        %2176 = vst [vmem:[%s364 + $0x40] sm:$0xff] %v2160
        %2177 = vst [vmem:[%s364 + $0x48] sm:$0xff] %v2161
        %2178 = vst [vmem:[%s364 + $0x50] sm:$0xff] %v2162
        %2179 = vst [vmem:[%s364 + $0x58] sm:$0xff] %v2163
        %2180 = vst [vmem:[%s364 + $0x60] sm:$0xff] %v2164
        %2181 = vst [vmem:[%s364 + $0x68] sm:$0xff] %v2165
        %2182 = vst [vmem:[%s364 + $0x70] sm:$0xff] %v2166
        %2183 = vst [vmem:[%s364 + $0x78] sm:$0xff] %v2167
      $region44: #{aspp_forward.1} parent=35 // pred_fallthru
        _
      %s2184 = smul.u32 8, %s21
      %p2185 = scmp.lt.s32.totalorder %s20, 1
      %s2186 = scalar_select %p2185, %s20, 1
      %p2187 = scmp.lt.s32.totalorder %s2184, 15
      %s2188 = scalar_select %p2187, %s2184, 15
      %s2189 = smul.addr %s2188, 2
      %s2190 = smul.addr %s2186, 32
      %s2191 = sadd.s32 %s2189, %s2190
      %s2192 = smul.addr %s2191, 8
      %s2193 = scalar_lea.vmem %s4, %s2192
      // Predicated region
      $region45: #{aspp_forward.1} parent=35 // pred_check
        %p2194 = pneg %p165
      $region46: #{aspp_forward.1} parent=35 // pred_check_branch
        %2196 = sbr.rel (%p2194) target = $region48
      $region47: #{aspp_forward.1} parent=35 // pred_region
        %s2197 = smul.u32 8, %s21
      $region48: #{aspp_forward.1} parent=35 // pred_fallthru
        _
    $region36: #{aspp_forward.1} parent=5 // pred_fallthru
      _
    %p2198 = scmp.le.s32.totalorder 2, %s10
    // Predicated region
    $region49: #{aspp_forward.1} parent=5 // pred_check
      %p2199 = pneg %p2198
    $region50: #{aspp_forward.1} parent=5 // pred_check_branch
      %2201 = sbr.rel (%p2199) target = $region52
    $region51: #{aspp_forward.1} parent=5 // pred_region
      %s2202 = ssub.s32 %s10, 2
      // Predicated region
      $region53: #{aspp_forward.1} parent=51 // pred_check
        %p2203 = pneg %p171
      $region54: #{aspp_forward.1} parent=51 // pred_check_branch
        %2205 = sbr.rel (%p2203) target = $region56
      $region55: #{aspp_forward.1} parent=51 // pred_region
        %s2206 = smul.u32 8, %s24
        %p2207 = scmp.lt.s32.totalorder %s23, 1
        %s2208 = scalar_select %p2207, %s23, 1
        %p2209 = scmp.lt.s32.totalorder %s2206, 15
        %s2210 = scalar_select %p2209, %s2206, 15
        %s2211 = smul.addr %s2210, 2
        %s2212 = smul.addr %s2208, 32
        %s2213 = sadd.s32 %s2211, %s2212
        %s2214 = smul.addr %s2213, 8
        %s2215 = scalar_lea.vmem %s4, %s2214
      $region56: #{aspp_forward.1} parent=51 // pred_fallthru
        _
    $region52: #{aspp_forward.1} parent=5 // pred_fallthru
      _
  $region6: #{aspp_forward.1} parent=0 // loop_footer
    %s14 = sadd.s32 1, %s10
  $region7: #{aspp_forward.1} parent=0 // loop_footer_branch
    %9 = sbr.rel target = $region3
  $region8: #{aspp_forward.1} parent=0 // loop_exit
    _

</llo_original>
